<compile_context>
chip_gen: v5e
topology: v5e:2x2
jax: 0.10.0
libtpu: 0.0.40
codegen_flags: <defaults>
</compile_context>

<pallas_src>
import math
from dataclasses import dataclass

import numpy as np
import jax
import jax.numpy as jnp
from jax.experimental import pallas as pl
from jax.experimental.pallas import tpu as pltpu


@dataclass
class DimState:
    action_mask: int = 10
    types_state_depot_hoop: int = 3
    types_have_raw_hoops: int = 2
    types_state_depot_bending_tube: int = 3
    types_have_raw_bending_tube: int = 2
    types_station_state_inner_left: int = 8
    types_station_state_inner_right: int = 6
    types_station_state_outer_left: int = 8
    types_station_state_outer_right: int = 6
    types_cutting_machine_state: int = 3
    types_is_full_products: int = 2
    types_produce_product_req: int = 2
    time_step: int = 1
    progress: int = 1
    max_env_len: int = 1
    types_raw_product_embd: int = 20
    types_worker_state: int = 7
    types_worker_task: int = 11
    types_worker_pose: int = 12
    types_agv_state: int = 4
    types_agv_task: int = 7
    types_agv_pose: int = 10
    types_box_state: int = 3
    types_box_task: int = 4
    max_num_entity: int = 3
    src_seq_len: int = 16 + 3 * 3 * max_num_entity


HIDDEN = 32
MLP_IN = 13            # 10 + 1 + 1 + 1
NUM_EMB_TOKENS = 39    # 12 scalar tokens + 9 entity fields * 3 entities
SEQ_LEN = 43           # 16 + 27
OUT_WIDTH = SEQ_LEN * HIDDEN   # 1376

SCALAR_NAMES = [
    "state_depot_hoop", "have_raw_hoops", "state_depot_bending_tube",
    "have_raw_bending_tube", "station_state_inner_left", "station_state_inner_right",
    "station_state_outer_left", "station_state_outer_right", "cutting_machine_state",
    "is_full_products", "produce_product_req", "raw_products",
]

# (state key, embedding table used) -- box_pose re-uses the agv_pose table, as in torch.
ENTITY_FIELDS = [
    ("worker_state", "worker_state"), ("worker_task", "worker_task"),
    ("worker_pose", "worker_pose"), ("agv_state", "agv_state"),
    ("agv_task", "agv_task"), ("agv_pose", "agv_pose"),
    ("box_state", "box_state"), ("box_task", "box_task"),
    ("box_pose", "agv_pose"),
]


def table_specs(ds: DimState):
    return [
        ("state_depot_hoop", ds.types_state_depot_hoop),
        ("have_raw_hoops", ds.types_have_raw_hoops),
        ("state_depot_bending_tube", ds.types_state_depot_bending_tube),
        ("have_raw_bending_tube", ds.types_have_raw_bending_tube),
        ("station_state_inner_left", ds.types_station_state_inner_left),
        ("station_state_inner_right", ds.types_station_state_inner_right),
        ("station_state_outer_left", ds.types_station_state_outer_left),
        ("station_state_outer_right", ds.types_station_state_outer_right),
        ("cutting_machine_state", ds.types_cutting_machine_state),
        ("is_full_products", ds.types_is_full_products),
        ("produce_product_req", ds.types_produce_product_req),
        ("raw_products", ds.types_raw_product_embd),
        ("worker_state", ds.types_worker_state),
        ("worker_task", ds.types_worker_task),
        ("worker_pose", ds.types_worker_pose),
        ("agv_state", ds.types_agv_state),
        ("agv_task", ds.types_agv_task),
        ("agv_pose", ds.types_agv_pose),
        ("box_state", ds.types_box_state),
        ("box_task", ds.types_box_task),
    ]


def _round_up(x, m):
    return (x + m - 1) // m * m


# ----------------------------- Pallas kernel ---------------------------------

def _feb_kernel(x_ref, idx_ref, mask_ref, w1_ref, b1_ref, w2e_ref, b2e_ref,
                sel_ref, et_ref, me_ref, out_ref):
    f32 = jnp.float32
    mm_dtype = et_ref.dtype                 # f32 or bf16 for the big matmul operands

    x = x_ref[...]                          # (TB, 13)  f32
    idx_f = idx_ref[...].astype(f32)        # (TB, 39)  exact small integers
    msk = mask_ref[...]                     # (TB, 43)  f32

    # --- 4 packed two-layer MLPs; second layer lands directly in output lanes.
    h = jnp.dot(x, w1_ref[...], preferred_element_type=f32) + b1_ref[...]   # (TB,128)
    h = jnp.maximum(h, 0.0).astype(mm_dtype)
    mlp = jnp.dot(h, w2e_ref[...], preferred_element_type=f32) + b2e_ref[...]  # (TB,1376)

    # --- multi-hot embedding lookup: all 39 tokens in one compare + one MXU matmul.
    # expected[b, v] = index expected by the token owning vocab lane v (0 on pad lanes)
    expected = jnp.dot(idx_f, sel_ref[...], preferred_element_type=f32)        # (TB, VP)
    lane = jax.lax.broadcasted_iota(jnp.int32, expected.shape, 1).astype(f32)
    mh = (jnp.abs(expected - lane) < 0.5).astype(f32).astype(mm_dtype)          # (TB, VP)
    emb = jnp.dot(mh, et_ref[...], preferred_element_type=f32)                  # (TB,1376)

    # --- mask expansion (43 -> 43*32) rides the MXU; one fused epilogue + store.
    maskx = jnp.dot(msk, me_ref[...], preferred_element_type=f32)               # (TB,1376)
    out_ref[...] = ((emb + mlp) * maskx).astype(out_ref.dtype)


def feature_embedding_block(x_mlp, idx, mask, packed, *, batch_tile=512,
                            out_dtype=jnp.float32):
    B = x_mlp.shape[0]
    VP = packed["et"].shape[0]
    assert x_mlp.shape == (B, MLP_IN)
    assert idx.shape == (B, NUM_EMB_TOKENS)
    assert mask.shape == (B, SEQ_LEN)
    assert packed["et"].shape == (VP, OUT_WIDTH)

    # Batch tile: multiple of 8, capped at ceil(B/2) so the grid keeps >=2 steps when
    # possible (lets dimension_semantics=('parallel',) use both v7x TensorCores).
    half = _round_up(max(1, (B + 1) // 2), 8)
    TB = max(8, min(_round_up(batch_tile, 8), half))
    B_pad = _round_up(B, TB)

    def pad_b(a):
        if B_pad == B:
            return a
        return jnp.pad(a, ((0, B_pad - B), (0, 0)))

    x_p, idx_p, mask_p = pad_b(x_mlp), pad_b(idx), pad_b(mask)

    flops = B_pad * 2 * (MLP_IN * 4 * HIDDEN + NUM_EMB_TOKENS * VP
                         + 4 * HIDDEN * OUT_WIDTH + VP * OUT_WIDTH
                         + SEQ_LEN * OUT_WIDTH)
    out_itemsize = jnp.dtype(out_dtype).itemsize
    param_bytes = sum(int(np.prod(v.shape)) * v.dtype.itemsize for v in packed.values())
    bytes_accessed = int(B_pad * (4 * (MLP_IN + NUM_EMB_TOKENS + SEQ_LEN)
                                  + out_itemsize * OUT_WIDTH) + param_bytes)

    out_flat = pl.pallas_call(
        _feb_kernel,
        out_shape=jax.ShapeDtypeStruct((B_pad, OUT_WIDTH), out_dtype),
        grid=(B_pad // TB,),
        in_specs=[
            pl.BlockSpec((TB, MLP_IN), lambda b: (b, 0)),             # x_mlp
            pl.BlockSpec((TB, NUM_EMB_TOKENS), lambda b: (b, 0)),     # indices (global)
            pl.BlockSpec((TB, SEQ_LEN), lambda b: (b, 0)),            # token mask
            # Constant blocks below keep a fixed index -> Pallas DMAs them only once.
            pl.BlockSpec((MLP_IN, 4 * HIDDEN), lambda b: (0, 0)),     # w1 (block-diag)
            pl.BlockSpec((1, 4 * HIDDEN), lambda b: (0, 0)),          # b1
            pl.BlockSpec((4 * HIDDEN, OUT_WIDTH), lambda b: (0, 0)),  # w2 expanded
            pl.BlockSpec((1, OUT_WIDTH), lambda b: (0, 0)),           # b2 expanded
            pl.BlockSpec((NUM_EMB_TOKENS, VP), lambda b: (0, 0)),     # selector (0/1)
            pl.BlockSpec((VP, OUT_WIDTH), lambda b: (0, 0)),          # expanded emb table
            pl.BlockSpec((SEQ_LEN, OUT_WIDTH), lambda b: (0, 0)),     # mask expansion (0/1)
        ],
        out_specs=pl.BlockSpec((TB, OUT_WIDTH), lambda b: (b, 0)),
        compiler_params=pltpu.CompilerParams(
            dimension_semantics=("parallel",),
            vmem_limit_bytes=64 * 1024 * 1024),
        cost_estimate=pl.CostEstimate(flops=flops, transcendentals=0,
                                      bytes_accessed=bytes_accessed),
    )(x_p, idx_p, mask_p, packed["w1"], packed["b1"], packed["w2e"],
      packed["b2e"], packed["sel"], packed["et"], packed["me"])

    return out_flat[:B].reshape(B, SEQ_LEN, HIDDEN)


# ----------------------------- parameter / input glue -------------------------

def init_params(key, hidden, ds, param_dtype=jnp.float32):
    """Returns (packed kernel params, raw torch-style params, per-token vocab offsets)."""
    H = hidden
    scale = math.sqrt(H)
    kmlp, kemb = jax.random.split(key)

    # (name, input dim, output token) -- slot order == x_mlp column order.
    mlp_defs = [("action_mask", ds.action_mask, 0),
                ("max_env_len", ds.max_env_len, 13),
                ("time_step", ds.time_step, 14),
                ("progress", ds.progress, 15)]
    mlp_keys = jax.random.split(kmlp, len(mlp_defs))

    def linear(k, fan_in, fan_out):
        bound = 1.0 / math.sqrt(fan_in)
        kw, kb = jax.random.split(k)
        w = jax.random.uniform(kw, (fan_in, fan_out), jnp.float32, -bound, bound)
        b = jax.random.uniform(kb, (fan_out,), jnp.float32, -bound, bound)
        return w, b

    assert sum(d for _, d, _ in mlp_defs) == MLP_IN
    w1 = np.zeros((MLP_IN, 4 * H), np.float32)
    b1 = np.zeros((4 * H,), np.float32)
    w2e = np.zeros((4 * H, OUT_WIDTH), np.float32)     # second layer -> output lanes
    b2e = np.zeros((OUT_WIDTH,), np.float32)
    raw_mlps = {}
    row = 0
    for slot, (mk, (name, din, tok)) in enumerate(zip(mlp_keys, mlp_defs)):
        k1, k2 = jax.random.split(mk)
        wa, ba = linear(k1, din, H)
        wb, bb = linear(k2, H, H)
        raw_mlps[name] = (wa, ba, wb, bb)
        c0, c1 = slot * H, (slot + 1) * H
        w1[row:row + din, c0:c1] = np.asarray(wa)
        b1[c0:c1] = np.asarray(ba)
        w2e[c0:c1, tok * H:(tok + 1) * H] = np.asarray(wb) * scale   # fold sqrt(H)
        b2e[tok * H:(tok + 1) * H] = np.asarray(bb) * scale
        row += din

    specs = table_specs(ds)
    vocab = dict(specs)
    tkeys = jax.random.split(kemb, len(specs))
    raw_tables = {name: jax.random.normal(tk, (v, H), jnp.float32)
                  for tk, (name, v) in zip(tkeys, specs)}

    # Per-idx-token metadata: every token gets its OWN disjoint vocab slice
    # (entity fields get per-entity copies; box_pose duplicates agv_pose).
    emb_tokens = [(name, 1 + j) for j, name in enumerate(SCALAR_NAMES)]
    for f, (_, tname) in enumerate(ENTITY_FIELDS):
        for e in range(ds.max_num_entity):
            emb_tokens.append((tname, 16 + ds.max_num_entity * f + e))
    assert len(emb_tokens) == NUM_EMB_TOKENS

    total_rows = sum(vocab[name] for name, _ in emb_tokens)          # 269 for defaults
    vp = _round_up(total_rows, 128)                                  # 384
    sel = np.zeros((NUM_EMB_TOKENS, vp), np.float32)
    et = np.zeros((vp, OUT_WIDTH), np.float32)
    tok_off = np.zeros((NUM_EMB_TOKENS,), np.int32)
    off = 0
    for j, (name, tok) in enumerate(emb_tokens):
        v = vocab[name]
        tok_off[j] = off
        sel[j, off:off + v] = 1.0
        et[off:off + v, tok * H:(tok + 1) * H] = np.asarray(raw_tables[name]) * scale
        off += v

    me = np.zeros((SEQ_LEN, OUT_WIDTH), np.float32)                  # mask expansion
    for t in range(SEQ_LEN):
        me[t, t * H:(t + 1) * H] = 1.0

    packed = {
        "w1": jnp.asarray(w1), "b1": jnp.asarray(b1)[None, :],
        "w2e": jnp.asarray(w2e, dtype=param_dtype),
        "b2e": jnp.asarray(b2e)[None, :],
        "sel": jnp.asarray(sel),
        "et": jnp.asarray(et, dtype=param_dtype),
        "me": jnp.asarray(me),
    }
    raw = {"mlps": raw_mlps, "tables": raw_tables}
    return packed, raw, jnp.asarray(tok_off)


def make_state(key, B, ds):
    ks = iter(jax.random.split(key, 40))
    state = {}
    state["action_mask"] = jax.random.uniform(next(ks), (B, ds.action_mask), jnp.float32)
    state["time_step"] = jax.random.uniform(next(ks), (B, ds.time_step), jnp.float32)
    state["progress"] = jax.random.uniform(next(ks), (B, ds.progress), jnp.float32)
    state["max_env_len"] = jax.random.uniform(next(ks), (B, ds.max_env_len), jnp.float32)
    vocab = dict(table_specs(ds))
    for name in SCALAR_NAMES:
        state[name] = jax.random.randint(next(ks), (B, 1), 0, vocab[name], dtype=jnp.int32)
    for field, tname in ENTITY_FIELDS:
        state[field] = jax.random.randint(next(ks), (B, ds.max_num_entity, 1), 0,
                                          vocab[tname], dtype=jnp.int32)
    state["token_mask"] = jax.random.bernoulli(next(ks), 0.8,
                                               (B, ds.src_seq_len)).astype(jnp.float32)
    return state


def pack_inputs(state, ds, tok_off):
    B = state["action_mask"].shape[0]
    x_mlp = jnp.concatenate(
        [state["action_mask"], state["max_env_len"], state["time_step"], state["progress"]],
        axis=-1).astype(jnp.float32)                                               # (B, 13)
    cols = [state[n].reshape(B, 1) for n in SCALAR_NAMES]
    for field, _ in ENTITY_FIELDS:
        cols.append(state[field].reshape(B, ds.max_num_entity))
    idx = (jnp.concatenate(cols, axis=1).astype(jnp.int32)
           + tok_off[None, :].astype(jnp.int32))                                   # (B, 39)
    mask = state["token_mask"].astype(jnp.float32)                                 # (B, 43)
    return x_mlp, idx, mask


def reference(state, raw, hidden):
    def mlp(x, p):
        w1, b1, w2, b2 = p
        return jnp.maximum(x @ w1 + b1, 0.0) @ w2 + b2
    am = mlp(state["action_mask"], raw["mlps"]["action_mask"])
    mel = mlp(state["max_env_len"], raw["mlps"]["max_env_len"])
    ts = mlp(state["time_step"], raw["mlps"]["time_step"])
    pg = mlp(state["progress"], raw["mlps"]["progress"])
    tabs = raw["tables"]
    seq = [am[:, None, :]]
    for name in SCALAR_NAMES:
        seq.append(tabs[name][state[name]])                     # (B, 1, H)
    seq += [mel[:, None, :], ts[:, None, :], pg[:, None, :]]
    for field, tname in ENTITY_FIELDS:
        seq.append(tabs[tname][state[field][..., 0]])            # (B, E, H)
    all_embs = jnp.concatenate(seq, axis=1)
    return all_embs * state["token_mask"][..., None] * math.sqrt(hidden)


if __name__ == "__main__":
    ds = DimState()
    assert ds.src_seq_len == SEQ_LEN and ds.max_num_entity == 3

    H = HIDDEN
    key = jax.random.PRNGKey(0)
    kparam, kstate1, kstate2 = jax.random.split(key, 3)

    # ---- f32 params / f32 output: matches the torch module within 1e-3 -------------
    packed, raw, tok_off = init_params(kparam, H, ds)
    B1 = 2
    state1 = make_state(kstate1, B1, ds)
    x1, i1, m1 = pack_inputs(state1, ds, tok_off)
    out1 = jax.block_until_ready(feature_embedding_block(x1, i1, m1, packed))
    ref1 = reference(state1, raw, H)
    assert out1.shape == (B1, SEQ_LEN, H)
    err1 = float(jnp.max(jnp.abs(out1 - ref1)))
    assert err1 < 1e-3, f"f32 max abs error {err1}"

    # ---- bf16 table/W2 operands + bf16 output, multi-step grid + batch padding -----
    packed_bf, raw_bf, tok_off_bf = init_params(kparam, H, ds, param_dtype=jnp.bfloat16)
    B2 = 19
    state2 = make_state(kstate2, B2, ds)
    x2, i2, m2 = pack_inputs(state2, ds, tok_off_bf)
    out2 = jax.block_until_ready(
        feature_embedding_block(x2, i2, m2, packed_bf, batch_tile=8,
                                out_dtype=jnp.bfloat16))
    ref2 = reference(state2, raw_bf, H)
    assert out2.shape == (B2, SEQ_LEN, H)
    err2 = float(jnp.max(jnp.abs(out2.astype(jnp.float32) - ref2)))
    assert err2 < 0.25, f"bf16 max abs error {err2}"

    print("KERNEL_OK")
</pallas_src>

<mosaic_0001>
module attributes {stable_mosaic.version = 11 : i64} {
  func.func @_feb_kernel(%arg0: i32, %arg1: memref<8x13xf32, #tpu.memory_space<vmem>>, %arg2: memref<8x39xi32, #tpu.memory_space<vmem>>, %arg3: memref<8x43xf32, #tpu.memory_space<vmem>>, %arg4: memref<13x128xf32, #tpu.memory_space<vmem>>, %arg5: memref<1x128xf32, #tpu.memory_space<vmem>>, %arg6: memref<128x1376xf32, #tpu.memory_space<vmem>>, %arg7: memref<1x1376xf32, #tpu.memory_space<vmem>>, %arg8: memref<39x384xf32, #tpu.memory_space<vmem>>, %arg9: memref<384x1376xf32, #tpu.memory_space<vmem>>, %arg10: memref<43x1376xf32, #tpu.memory_space<vmem>>, %arg11: memref<8x1376xf32, #tpu.memory_space<vmem>>) attributes {dimension_semantics = [#tpu.dimension_semantics<parallel>], iteration_bounds = array<i64: 1>, scalar_prefetch = 0 : i64, scratch_operands = 0 : i64, tpu.core_type = #tpu.core_type<tc>, window_params = [{transform_indices = @transform_0, window_bounds = array<i64: 8, 13>}, {transform_indices = @transform_1, window_bounds = array<i64: 8, 39>}, {transform_indices = @transform_2, window_bounds = array<i64: 8, 43>}, {pipeline_mode = #tpu.pipeline_mode<synchronous>, transform_indices = @transform_3, window_bounds = array<i64: 13, 128>}, {pipeline_mode = #tpu.pipeline_mode<synchronous>, transform_indices = @transform_4, window_bounds = array<i64: 1, 128>}, {pipeline_mode = #tpu.pipeline_mode<synchronous>, transform_indices = @transform_5, window_bounds = array<i64: 128, 1376>}, {pipeline_mode = #tpu.pipeline_mode<synchronous>, transform_indices = @transform_6, window_bounds = array<i64: 1, 1376>}, {pipeline_mode = #tpu.pipeline_mode<synchronous>, transform_indices = @transform_7, window_bounds = array<i64: 39, 384>}, {pipeline_mode = #tpu.pipeline_mode<synchronous>, transform_indices = @transform_8, window_bounds = array<i64: 384, 1376>}, {pipeline_mode = #tpu.pipeline_mode<synchronous>, transform_indices = @transform_9, window_bounds = array<i64: 43, 1376>}, {transform_indices = @transform_10, window_bounds = array<i64: 8, 1376>}]} {
    %c0 = arith.constant 0 : index
    %c0_0 = arith.constant 0 : index
    %0 = vector.load %arg1[%c0, %c0_0] : memref<8x13xf32, #tpu.memory_space<vmem>>, vector<8x13xf32>
    %c0_1 = arith.constant 0 : index
    %c0_2 = arith.constant 0 : index
    %1 = vector.load %arg2[%c0_1, %c0_2] : memref<8x39xi32, #tpu.memory_space<vmem>>, vector<8x39xi32>
    %2 = arith.sitofp %1 : vector<8x39xi32> to vector<8x39xf32>
    %c0_3 = arith.constant 0 : index
    %c0_4 = arith.constant 0 : index
    %3 = vector.load %arg3[%c0_3, %c0_4] : memref<8x43xf32, #tpu.memory_space<vmem>>, vector<8x43xf32>
    %c0_5 = arith.constant 0 : index
    %c0_6 = arith.constant 0 : index
    %4 = vector.load %arg4[%c0_5, %c0_6] : memref<13x128xf32, #tpu.memory_space<vmem>>, vector<13x128xf32>
    %cst = arith.constant dense<0.000000e+00> : vector<8x128xf32>
    %5 = tpu.matmul %0, %4, %cst {dimension_numbers = #tpu.dot_dimension_numbers<[1], [0], [0], [1], [0, 0, 1, 1], [], []>} : vector<8x13xf32>, vector<13x128xf32>, vector<8x128xf32> -> vector<8x128xf32>
    %c0_7 = arith.constant 0 : index
    %c0_8 = arith.constant 0 : index
    %6 = vector.load %arg5[%c0_7, %c0_8] : memref<1x128xf32, #tpu.memory_space<vmem>>, vector<1x128xf32>
    %7 = vector.broadcast %6 : vector<1x128xf32> to vector<8x128xf32>
    %8 = arith.addf %5, %7 : vector<8x128xf32>
    %cst_9 = arith.constant 0.000000e+00 : f32
    %9 = vector.broadcast %cst_9 : f32 to vector<8x128xf32>
    %10 = arith.maximumf %8, %9 : vector<8x128xf32>
    %c0_10 = arith.constant 0 : index
    %c0_11 = arith.constant 0 : index
    %11 = vector.load %arg6[%c0_10, %c0_11] : memref<128x1376xf32, #tpu.memory_space<vmem>>, vector<128x1376xf32>
    %cst_12 = arith.constant dense<0.000000e+00> : vector<8x1376xf32>
    %12 = tpu.matmul %10, %11, %cst_12 {dimension_numbers = #tpu.dot_dimension_numbers<[1], [0], [0], [1], [0, 0, 1, 1], [], []>} : vector<8x128xf32>, vector<128x1376xf32>, vector<8x1376xf32> -> vector<8x1376xf32>
    %c0_13 = arith.constant 0 : index
    %c0_14 = arith.constant 0 : index
    %13 = vector.load %arg7[%c0_13, %c0_14] : memref<1x1376xf32, #tpu.memory_space<vmem>>, vector<1x1376xf32>
    %14 = vector.broadcast %13 : vector<1x1376xf32> to vector<8x1376xf32>
    %15 = arith.addf %12, %14 : vector<8x1376xf32>
    %c0_15 = arith.constant 0 : index
    %c0_16 = arith.constant 0 : index
    %16 = vector.load %arg8[%c0_15, %c0_16] : memref<39x384xf32, #tpu.memory_space<vmem>>, vector<39x384xf32>
    %cst_17 = arith.constant dense<0.000000e+00> : vector<8x384xf32>
    %17 = tpu.matmul %2, %16, %cst_17 {dimension_numbers = #tpu.dot_dimension_numbers<[1], [0], [0], [1], [0, 0, 1, 1], [], []>} : vector<8x39xf32>, vector<39x384xf32>, vector<8x384xf32> -> vector<8x384xf32>
    %18 = tpu.iota {dimensions = array<i32: 1>} : vector<8x384xi32>
    %19 = arith.sitofp %18 : vector<8x384xi32> to vector<8x384xf32>
    %20 = arith.subf %17, %19 : vector<8x384xf32>
    %21 = math.absf %20 : vector<8x384xf32>
    %cst_18 = arith.constant 5.000000e-01 : f32
    %22 = vector.broadcast %cst_18 : f32 to vector<8x384xf32>
    %23 = arith.cmpf olt, %21, %22 : vector<8x384xf32>
    %24 = arith.extui %23 : vector<8x384xi1> to vector<8x384xi32>
    %25 = arith.sitofp %24 : vector<8x384xi32> to vector<8x384xf32>
    %c0_19 = arith.constant 0 : index
    %c0_20 = arith.constant 0 : index
    %26 = vector.load %arg9[%c0_19, %c0_20] : memref<384x1376xf32, #tpu.memory_space<vmem>>, vector<384x1376xf32>
    %cst_21 = arith.constant dense<0.000000e+00> : vector<8x1376xf32>
    %27 = tpu.matmul %25, %26, %cst_21 {dimension_numbers = #tpu.dot_dimension_numbers<[1], [0], [0], [1], [0, 0, 1, 1], [], []>} : vector<8x384xf32>, vector<384x1376xf32>, vector<8x1376xf32> -> vector<8x1376xf32>
    %c0_22 = arith.constant 0 : index
    %c0_23 = arith.constant 0 : index
    %28 = vector.load %arg10[%c0_22, %c0_23] : memref<43x1376xf32, #tpu.memory_space<vmem>>, vector<43x1376xf32>
    %cst_24 = arith.constant dense<0.000000e+00> : vector<8x1376xf32>
    %29 = tpu.matmul %3, %28, %cst_24 {dimension_numbers = #tpu.dot_dimension_numbers<[1], [0], [0], [1], [0, 0, 1, 1], [], []>} : vector<8x43xf32>, vector<43x1376xf32>, vector<8x1376xf32> -> vector<8x1376xf32>
    %30 = arith.addf %27, %15 : vector<8x1376xf32>
    %31 = arith.mulf %30, %29 : vector<8x1376xf32>
    %c0_25 = arith.constant 0 : index
    %c0_26 = arith.constant 0 : index
    %32 = vector.load %arg11[%c0_25, %c0_26] : memref<8x1376xf32, #tpu.memory_space<vmem>>, vector<8x1376xf32>
    tpu.vector_store %arg11[%c0_25, %c0_26], %31 {strides = array<i32>} : memref<8x1376xf32, #tpu.memory_space<vmem>>, vector<8x1376xf32>,
    return
  }
  func.func @transform_0(%arg0: i32) -> (i32, i32) {
    %c0_i32 = arith.constant 0 : i32
    %c0_i32_0 = arith.constant 0 : i32
    return %arg0, %c0_i32 : i32, i32
  }
  func.func @transform_1(%arg0: i32) -> (i32, i32) {
    %c0_i32 = arith.constant 0 : i32
    %c0_i32_0 = arith.constant 0 : i32
    return %arg0, %c0_i32 : i32, i32
  }
  func.func @transform_2(%arg0: i32) -> (i32, i32) {
    %c0_i32 = arith.constant 0 : i32
    %c0_i32_0 = arith.constant 0 : i32
    return %arg0, %c0_i32 : i32, i32
  }
  func.func @transform_3(%arg0: i32) -> (i32, i32) {
    %c0_i32 = arith.constant 0 : i32
    %c0_i32_0 = arith.constant 0 : i32
    %c0_i32_1 = arith.constant 0 : i32
    return %c0_i32, %c0_i32_0 : i32, i32
  }
  func.func @transform_4(%arg0: i32) -> (i32, i32) {
    %c0_i32 = arith.constant 0 : i32
    %c0_i32_0 = arith.constant 0 : i32
    %c0_i32_1 = arith.constant 0 : i32
    return %c0_i32, %c0_i32_0 : i32, i32
  }
  func.func @transform_5(%arg0: i32) -> (i32, i32) {
    %c0_i32 = arith.constant 0 : i32
    %c0_i32_0 = arith.constant 0 : i32
    %c0_i32_1 = arith.constant 0 : i32
    return %c0_i32, %c0_i32_0 : i32, i32
  }
  func.func @transform_6(%arg0: i32) -> (i32, i32) {
    %c0_i32 = arith.constant 0 : i32
    %c0_i32_0 = arith.constant 0 : i32
    %c0_i32_1 = arith.constant 0 : i32
    return %c0_i32, %c0_i32_0 : i32, i32
  }
  func.func @transform_7(%arg0: i32) -> (i32, i32) {
    %c0_i32 = arith.constant 0 : i32
    %c0_i32_0 = arith.constant 0 : i32
    %c0_i32_1 = arith.constant 0 : i32
    return %c0_i32, %c0_i32_0 : i32, i32
  }
  func.func @transform_8(%arg0: i32) -> (i32, i32) {
    %c0_i32 = arith.constant 0 : i32
    %c0_i32_0 = arith.constant 0 : i32
    %c0_i32_1 = arith.constant 0 : i32
    return %c0_i32, %c0_i32_0 : i32, i32
  }
  func.func @transform_9(%arg0: i32) -> (i32, i32) {
    %c0_i32 = arith.constant 0 : i32
    %c0_i32_0 = arith.constant 0 : i32
    %c0_i32_1 = arith.constant 0 : i32
    return %c0_i32, %c0_i32_0 : i32, i32
  }
  func.func @transform_10(%arg0: i32) -> (i32, i32) {
    %c0_i32 = arith.constant 0 : i32
    %c0_i32_0 = arith.constant 0 : i32
    return %arg0, %c0_i32 : i32, i32
  }
}

</mosaic_0001>

<llo_original>
// kernel: tpu_custom_call.1
$region0: #{tpu_custom_call.1}
  #allocation0 [shape = 'u32[]', space=smem, size = 0x4, offset = 0x4, fixed_abs, tag = 'smem constant byte address 0x4 - core index']
  #allocation1 [shape = 'u32[72,128]{1,0:T(1,128)}', space=vmem, size = 0x9000, scoped, tag = 'internal scratch']
  %s0 = inlined_call_operand.vmem [shape: f32[8,13], index: 0, kind: input, shape index: {}]
  %s1 = inlined_call_operand.vmem [shape: s32[8,39], index: 1, kind: input, shape index: {}]
  %s2 = inlined_call_operand.vmem [shape: f32[8,43], index: 2, kind: input, shape index: {}]
  %s3 = inlined_call_operand.vmem [shape: f32[13,128], index: 3, kind: input, shape index: {}]
  %s4 = inlined_call_operand.vmem [shape: f32[1,128], index: 4, kind: input, shape index: {}]
  %s5 = inlined_call_operand.vmem [shape: f32[128,1376], index: 5, kind: input, shape index: {}]
  %s6 = inlined_call_operand.vmem [shape: f32[1,1376], index: 6, kind: input, shape index: {}]
  %s7 = inlined_call_operand.vmem [shape: f32[39,384], index: 7, kind: input, shape index: {}]
  %s8 = inlined_call_operand.vmem [shape: f32[384,1376], index: 8, kind: input, shape index: {}]
  %s9 = inlined_call_operand.vmem [shape: f32[43,1376], index: 9, kind: input, shape index: {}]
  %s10 = inlined_call_operand.hbm [shape: f32[8,1376], index: 10, kind: output, shape index: {}]
  %s11 = sld [smem:[#allocation0]]
  $region50: #{tpu_custom_call.1} parent=0
    _
  %s13 = ssub.s32 1, %s11
  %s14 = scalar_select 0, %s13, %s11
  $region1: #{tpu_custom_call.1} parent=0
    #allocation2 [shape = 'u8[45056]{0}', space=vmem, size = 0xb000, scoped, tag = 'output window, operand 0, single buffered']
    #allocation3 [shape = 's32[1]{0}', space=sflag, size = 0x4, scoped, tag = 'scoped memory for tpu_custom_call.1']
    %15 = vsyncpa [#allocation3], 0
    // Predicated region
    $region2: #{tpu_custom_call.1} parent=1 // pred_check
      _
    $region3: #{tpu_custom_call.1} parent=1 // pred_check_branch
      %17 = sbr.rel (0) target = $region5
    $region4: #{tpu_custom_call.1} parent=1 // pred_region
      _
    $region5: #{tpu_custom_call.1} parent=1 // pred_fallthru
      _
    // Predicated region
    $region6: #{tpu_custom_call.1} parent=1 // pred_check
      _
    $region7: #{tpu_custom_call.1} parent=1 // pred_check_branch
      %19 = sbr.rel (0) target = $region9
    $region8: #{tpu_custom_call.1} parent=1 // pred_region
      _
    $region9: #{tpu_custom_call.1} parent=1 // pred_fallthru
      _
    // Predicated region
    $region10: #{tpu_custom_call.1} parent=1 // pred_check
      _
    $region11: #{tpu_custom_call.1} parent=1 // pred_check_branch
      %21 = sbr.rel (0) target = $region13
    $region12: #{tpu_custom_call.1} parent=1 // pred_region
      _
    $region13: #{tpu_custom_call.1} parent=1 // pred_fallthru
      _
    // Predicated region
    $region14: #{tpu_custom_call.1} parent=1 // pred_check
      _
    $region15: #{tpu_custom_call.1} parent=1 // pred_check_branch
      %23 = sbr.rel (0) target = $region17
    $region16: #{tpu_custom_call.1} parent=1 // pred_region
      _
    $region17: #{tpu_custom_call.1} parent=1 // pred_fallthru
      _
    // Predicated region
    $region18: #{tpu_custom_call.1} parent=1 // pred_check
      _
    $region19: #{tpu_custom_call.1} parent=1 // pred_check_branch
      %25 = sbr.rel (0) target = $region21
    $region20: #{tpu_custom_call.1} parent=1 // pred_region
      _
    $region21: #{tpu_custom_call.1} parent=1 // pred_fallthru
      _
    // Predicated region
    $region22: #{tpu_custom_call.1} parent=1 // pred_check
      _
    $region23: #{tpu_custom_call.1} parent=1 // pred_check_branch
      %27 = sbr.rel (0) target = $region25
    $region24: #{tpu_custom_call.1} parent=1 // pred_region
      _
    $region25: #{tpu_custom_call.1} parent=1 // pred_fallthru
      _
    // Predicated region
    $region26: #{tpu_custom_call.1} parent=1 // pred_check
      _
    $region27: #{tpu_custom_call.1} parent=1 // pred_check_branch
      %29 = sbr.rel (0) target = $region29
    $region28: #{tpu_custom_call.1} parent=1 // pred_region
      _
    $region29: #{tpu_custom_call.1} parent=1 // pred_fallthru
      _
    // Predicated region
    $region30: #{tpu_custom_call.1} parent=1 // pred_check
      _
    $region31: #{tpu_custom_call.1} parent=1 // pred_check_branch
      %31 = sbr.rel (0) target = $region33
    $region32: #{tpu_custom_call.1} parent=1 // pred_region
      _
    $region33: #{tpu_custom_call.1} parent=1 // pred_fallthru
      _
    // Predicated region
    $region34: #{tpu_custom_call.1} parent=1 // pred_check
      _
    $region35: #{tpu_custom_call.1} parent=1 // pred_check_branch
      %33 = sbr.rel (0) target = $region37
    $region36: #{tpu_custom_call.1} parent=1 // pred_region
      _
    $region37: #{tpu_custom_call.1} parent=1 // pred_fallthru
      _
    // Predicated region
    $region38: #{tpu_custom_call.1} parent=1 // pred_check
      _
    $region39: #{tpu_custom_call.1} parent=1 // pred_check_branch
      %35 = sbr.rel (0) target = $region41
    $region40: #{tpu_custom_call.1} parent=1 // pred_region
      _
    $region41: #{tpu_custom_call.1} parent=1 // pred_fallthru
      _
    %v36 = vld [vmem:[%s0] sm:$0xff]
    %v37 = vld [vmem:[%s1] sm:$0xff]
    %v38 = vcvt.s32.f32 %v37
    %v39 = vld [vmem:[%s2] sm:$0xff]
    %v40 = vld [vmem:[%s3] sm:$0xff]
    %v41 = vld [vmem:[%s3 + $0x8] sm:$0x1f]
    %v42 = vld [vmem:[%s4] sm:$0x1]
    %v44 = vperm.slane %v42, 0
    %vm46 = vcmask 105472
    %v48 = vsel %vm46, %v36, 0
    %vm50 = vcmask 1044480
    %v52 = vsel %vm50, %v41, 0
    %54 = vmatpush.msra.mxu0 0.0
    %55 = vmatpush.msra.mxu0 0.0
    %56 = vmatpush.msra.mxu0 0.0
    %57 = vmatpush.msra.mxu0 0.0
    %58 = vmatpush.msra.mxu0 0.0
    %59 = vmatpush.msra.mxu0 0.0
    %60 = vmatpush.msra.mxu0 0.0
    %61 = vmatpush.msra.mxu0 0.0
    %62 = vmatpush.msra.mxu0 0.0
    %63 = vmatpush.msra.mxu0 0.0
    %64 = vmatpush.msra.mxu0 0.0
    %65 = vmatpush.msra.mxu0 0.0
    %66 = vmatpush.msra.mxu0 0.0
    %67 = vmatpush.msra.mxu0 0.0
    %68 = vmatpush.msra.mxu0 %v52
    %69 = vmatpush.msra.mxu0 %v40
    %70 = vmatmul.f32.gmra.mxu0 %v48
    %v71 = vpop.f32.mrf.mxu0
    %v72 = vadd.f32 %v44, %v71
    %73 = vdwg.mxu0
    %v74 = vmax.f32 %v72, 0.0
    %v75 = vld [vmem:[%s5] sm:$0xff]
    %v76 = vld [vmem:[%s5 + $0x8] sm:$0xff]
    %v77 = vld [vmem:[%s5 + $0x10] sm:$0xff]
    %v78 = vld [vmem:[%s5 + $0x18] sm:$0xff]
    %v79 = vld [vmem:[%s5 + $0x20] sm:$0xff]
    %v80 = vld [vmem:[%s5 + $0x28] sm:$0xff]
    %v81 = vld [vmem:[%s5 + $0x30] sm:$0xff]
    %v82 = vld [vmem:[%s5 + $0x38] sm:$0xff]
    %v83 = vld [vmem:[%s5 + $0x40] sm:$0xff]
    %v84 = vld [vmem:[%s5 + $0x48] sm:$0xff]
    %v85 = vld [vmem:[%s5 + $0x50] sm:$0xff]
    %v86 = vld [vmem:[%s5 + $0x58] sm:$0xff]
    %v87 = vld [vmem:[%s5 + $0x60] sm:$0xff]
    %v88 = vld [vmem:[%s5 + $0x68] sm:$0xff]
    %v89 = vld [vmem:[%s5 + $0x70] sm:$0xff]
    %v90 = vld [vmem:[%s5 + $0x78] sm:$0xff]
    %v91 = vld [vmem:[%s5 + $0x80] sm:$0xff]
    %v92 = vld [vmem:[%s5 + $0x88] sm:$0xff]
    %v93 = vld [vmem:[%s5 + $0x90] sm:$0xff]
    %v94 = vld [vmem:[%s5 + $0x98] sm:$0xff]
    %v95 = vld [vmem:[%s5 + $0xa0] sm:$0xff]
    %v96 = vld [vmem:[%s5 + $0xa8] sm:$0xff]
    %v97 = vld [vmem:[%s5 + $0xb0] sm:$0xff]
    %v98 = vld [vmem:[%s5 + $0xb8] sm:$0xff]
    %v99 = vld [vmem:[%s5 + $0xc0] sm:$0xff]
    %v100 = vld [vmem:[%s5 + $0xc8] sm:$0xff]
    %v101 = vld [vmem:[%s5 + $0xd0] sm:$0xff]
    %v102 = vld [vmem:[%s5 + $0xd8] sm:$0xff]
    %v103 = vld [vmem:[%s5 + $0xe0] sm:$0xff]
    %v104 = vld [vmem:[%s5 + $0xe8] sm:$0xff]
    %v105 = vld [vmem:[%s5 + $0xf0] sm:$0xff]
    %v106 = vld [vmem:[%s5 + $0xf8] sm:$0xff]
    %v107 = vld [vmem:[%s5 + $0x100] sm:$0xff]
    %v108 = vld [vmem:[%s5 + $0x108] sm:$0xff]
    %v109 = vld [vmem:[%s5 + $0x110] sm:$0xff]
    %v110 = vld [vmem:[%s5 + $0x118] sm:$0xff]
    %v111 = vld [vmem:[%s5 + $0x120] sm:$0xff]
    %v112 = vld [vmem:[%s5 + $0x128] sm:$0xff]
    %v113 = vld [vmem:[%s5 + $0x130] sm:$0xff]
    %v114 = vld [vmem:[%s5 + $0x138] sm:$0xff]
    %v115 = vld [vmem:[%s5 + $0x140] sm:$0xff]
    %v116 = vld [vmem:[%s5 + $0x148] sm:$0xff]
    %v117 = vld [vmem:[%s5 + $0x150] sm:$0xff]
    %v118 = vld [vmem:[%s5 + $0x158] sm:$0xff]
    %v119 = vld [vmem:[%s5 + $0x160] sm:$0xff]
    %v120 = vld [vmem:[%s5 + $0x168] sm:$0xff]
    %v121 = vld [vmem:[%s5 + $0x170] sm:$0xff]
    %v122 = vld [vmem:[%s5 + $0x178] sm:$0xff]
    %v123 = vld [vmem:[%s5 + $0x180] sm:$0xff]
    %v124 = vld [vmem:[%s5 + $0x188] sm:$0xff]
    %v125 = vld [vmem:[%s5 + $0x190] sm:$0xff]
    %v126 = vld [vmem:[%s5 + $0x198] sm:$0xff]
    %v127 = vld [vmem:[%s5 + $0x1a0] sm:$0xff]
    %v128 = vld [vmem:[%s5 + $0x1a8] sm:$0xff]
    %v129 = vld [vmem:[%s5 + $0x1b0] sm:$0xff]
    %v130 = vld [vmem:[%s5 + $0x1b8] sm:$0xff]
    %v131 = vld [vmem:[%s5 + $0x1c0] sm:$0xff]
    %v132 = vld [vmem:[%s5 + $0x1c8] sm:$0xff]
    %v133 = vld [vmem:[%s5 + $0x1d0] sm:$0xff]
    %v134 = vld [vmem:[%s5 + $0x1d8] sm:$0xff]
    %v135 = vld [vmem:[%s5 + $0x1e0] sm:$0xff]
    %v136 = vld [vmem:[%s5 + $0x1e8] sm:$0xff]
    %v137 = vld [vmem:[%s5 + $0x1f0] sm:$0xff]
    %v138 = vld [vmem:[%s5 + $0x1f8] sm:$0xff]
    %v139 = vld [vmem:[%s5 + $0x200] sm:$0xff]
    %v140 = vld [vmem:[%s5 + $0x208] sm:$0xff]
    %v141 = vld [vmem:[%s5 + $0x210] sm:$0xff]
    %v142 = vld [vmem:[%s5 + $0x218] sm:$0xff]
    %v143 = vld [vmem:[%s5 + $0x220] sm:$0xff]
    %v144 = vld [vmem:[%s5 + $0x228] sm:$0xff]
    %v145 = vld [vmem:[%s5 + $0x230] sm:$0xff]
    %v146 = vld [vmem:[%s5 + $0x238] sm:$0xff]
    %v147 = vld [vmem:[%s5 + $0x240] sm:$0xff]
    %v148 = vld [vmem:[%s5 + $0x248] sm:$0xff]
    %v149 = vld [vmem:[%s5 + $0x250] sm:$0xff]
    %v150 = vld [vmem:[%s5 + $0x258] sm:$0xff]
    %v151 = vld [vmem:[%s5 + $0x260] sm:$0xff]
    %v152 = vld [vmem:[%s5 + $0x268] sm:$0xff]
    %v153 = vld [vmem:[%s5 + $0x270] sm:$0xff]
    %v154 = vld [vmem:[%s5 + $0x278] sm:$0xff]
    %v155 = vld [vmem:[%s5 + $0x280] sm:$0xff]
    %v156 = vld [vmem:[%s5 + $0x288] sm:$0xff]
    %v157 = vld [vmem:[%s5 + $0x290] sm:$0xff]
    %v158 = vld [vmem:[%s5 + $0x298] sm:$0xff]
    %v159 = vld [vmem:[%s5 + $0x2a0] sm:$0xff]
    %v160 = vld [vmem:[%s5 + $0x2a8] sm:$0xff]
    %v161 = vld [vmem:[%s5 + $0x2b0] sm:$0xff]
    %v162 = vld [vmem:[%s5 + $0x2b8] sm:$0xff]
    %v163 = vld [vmem:[%s5 + $0x2c0] sm:$0xff]
    %v164 = vld [vmem:[%s5 + $0x2c8] sm:$0xff]
    %v165 = vld [vmem:[%s5 + $0x2d0] sm:$0xff]
    %v166 = vld [vmem:[%s5 + $0x2d8] sm:$0xff]
    %v167 = vld [vmem:[%s5 + $0x2e0] sm:$0xff]
    %v168 = vld [vmem:[%s5 + $0x2e8] sm:$0xff]
    %v169 = vld [vmem:[%s5 + $0x2f0] sm:$0xff]
    %v170 = vld [vmem:[%s5 + $0x2f8] sm:$0xff]
    %v171 = vld [vmem:[%s5 + $0x300] sm:$0xff]
    %v172 = vld [vmem:[%s5 + $0x308] sm:$0xff]
    %v173 = vld [vmem:[%s5 + $0x310] sm:$0xff]
    %v174 = vld [vmem:[%s5 + $0x318] sm:$0xff]
    %v175 = vld [vmem:[%s5 + $0x320] sm:$0xff]
    %v176 = vld [vmem:[%s5 + $0x328] sm:$0xff]
    %v177 = vld [vmem:[%s5 + $0x330] sm:$0xff]
    %v178 = vld [vmem:[%s5 + $0x338] sm:$0xff]
    %v179 = vld [vmem:[%s5 + $0x340] sm:$0xff]
    %v180 = vld [vmem:[%s5 + $0x348] sm:$0xff]
    %v181 = vld [vmem:[%s5 + $0x350] sm:$0xff]
    %v182 = vld [vmem:[%s5 + $0x358] sm:$0xff]
    %v183 = vld [vmem:[%s5 + $0x360] sm:$0xff]
    %v184 = vld [vmem:[%s5 + $0x368] sm:$0xff]
    %v185 = vld [vmem:[%s5 + $0x370] sm:$0xff]
    %v186 = vld [vmem:[%s5 + $0x378] sm:$0xff]
    %v187 = vld [vmem:[%s5 + $0x380] sm:$0xff]
    %v188 = vld [vmem:[%s5 + $0x388] sm:$0xff]
    %v189 = vld [vmem:[%s5 + $0x390] sm:$0xff]
    %v190 = vld [vmem:[%s5 + $0x398] sm:$0xff]
    %v191 = vld [vmem:[%s5 + $0x3a0] sm:$0xff]
    %v192 = vld [vmem:[%s5 + $0x3a8] sm:$0xff]
    %v193 = vld [vmem:[%s5 + $0x3b0] sm:$0xff]
    %v194 = vld [vmem:[%s5 + $0x3b8] sm:$0xff]
    %v195 = vld [vmem:[%s5 + $0x3c0] sm:$0xff]
    %v196 = vld [vmem:[%s5 + $0x3c8] sm:$0xff]
    %v197 = vld [vmem:[%s5 + $0x3d0] sm:$0xff]
    %v198 = vld [vmem:[%s5 + $0x3d8] sm:$0xff]
    %v199 = vld [vmem:[%s5 + $0x3e0] sm:$0xff]
    %v200 = vld [vmem:[%s5 + $0x3e8] sm:$0xff]
    %v201 = vld [vmem:[%s5 + $0x3f0] sm:$0xff]
    %v202 = vld [vmem:[%s5 + $0x3f8] sm:$0xff]
    %v203 = vld [vmem:[%s5 + $0x400] sm:$0xff]
    %v204 = vld [vmem:[%s5 + $0x408] sm:$0xff]
    %v205 = vld [vmem:[%s5 + $0x410] sm:$0xff]
    %v206 = vld [vmem:[%s5 + $0x418] sm:$0xff]
    %v207 = vld [vmem:[%s5 + $0x420] sm:$0xff]
    %v208 = vld [vmem:[%s5 + $0x428] sm:$0xff]
    %v209 = vld [vmem:[%s5 + $0x430] sm:$0xff]
    %v210 = vld [vmem:[%s5 + $0x438] sm:$0xff]
    %v211 = vld [vmem:[%s5 + $0x440] sm:$0xff]
    %v212 = vld [vmem:[%s5 + $0x448] sm:$0xff]
    %v213 = vld [vmem:[%s5 + $0x450] sm:$0xff]
    %v214 = vld [vmem:[%s5 + $0x458] sm:$0xff]
    %v215 = vld [vmem:[%s5 + $0x460] sm:$0xff]
    %v216 = vld [vmem:[%s5 + $0x468] sm:$0xff]
    %v217 = vld [vmem:[%s5 + $0x470] sm:$0xff]
    %v218 = vld [vmem:[%s5 + $0x478] sm:$0xff]
    %v219 = vld [vmem:[%s5 + $0x480] sm:$0xff]
    %v220 = vld [vmem:[%s5 + $0x488] sm:$0xff]
    %v221 = vld [vmem:[%s5 + $0x490] sm:$0xff]
    %v222 = vld [vmem:[%s5 + $0x498] sm:$0xff]
    %v223 = vld [vmem:[%s5 + $0x4a0] sm:$0xff]
    %v224 = vld [vmem:[%s5 + $0x4a8] sm:$0xff]
    %v225 = vld [vmem:[%s5 + $0x4b0] sm:$0xff]
    %v226 = vld [vmem:[%s5 + $0x4b8] sm:$0xff]
    %v227 = vld [vmem:[%s5 + $0x4c0] sm:$0xff]
    %v228 = vld [vmem:[%s5 + $0x4c8] sm:$0xff]
    %v229 = vld [vmem:[%s5 + $0x4d0] sm:$0xff]
    %v230 = vld [vmem:[%s5 + $0x4d8] sm:$0xff]
    %v231 = vld [vmem:[%s5 + $0x4e0] sm:$0xff]
    %v232 = vld [vmem:[%s5 + $0x4e8] sm:$0xff]
    %v233 = vld [vmem:[%s5 + $0x4f0] sm:$0xff]
    %v234 = vld [vmem:[%s5 + $0x4f8] sm:$0xff]
    %v235 = vld [vmem:[%s5 + $0x500] sm:$0xff]
    %v236 = vld [vmem:[%s5 + $0x508] sm:$0xff]
    %v237 = vld [vmem:[%s5 + $0x510] sm:$0xff]
    %v238 = vld [vmem:[%s5 + $0x518] sm:$0xff]
    %v239 = vld [vmem:[%s5 + $0x520] sm:$0xff]
    %v240 = vld [vmem:[%s5 + $0x528] sm:$0xff]
    %v241 = vld [vmem:[%s5 + $0x530] sm:$0xff]
    %v242 = vld [vmem:[%s5 + $0x538] sm:$0xff]
    %v243 = vld [vmem:[%s5 + $0x540] sm:$0xff]
    %v244 = vld [vmem:[%s5 + $0x548] sm:$0xff]
    %v245 = vld [vmem:[%s5 + $0x550] sm:$0xff]
    %v246 = vld [vmem:[%s5 + $0x558] sm:$0xff]
    %v247 = vld [vmem:[%s5 + $0x560] sm:$0xff]
    %v248 = vld [vmem:[%s5 + $0x568] sm:$0xff]
    %v249 = vld [vmem:[%s5 + $0x570] sm:$0xff]
    %v250 = vld [vmem:[%s5 + $0x578] sm:$0xff]
    %v251 = vld [vmem:[%s6] sm:$0xff]
    %v252 = vld [vmem:[%s6 + $0x8] sm:$0x7]
    %v255 = vperm.slane %v251, 0
    %v256 = vperm.slane %v251, 1
    %v257 = vperm.slane %v251, 2
    %v258 = vperm.slane %v251, 3
    %v259 = vperm.slane %v251, 4
    %v260 = vperm.slane %v251, 5
    %v261 = vperm.slane %v251, 6
    %v262 = vperm.slane %v251, 7
    %v263 = vperm.slane %v252, 0
    %v264 = vperm.slane %v252, 1
    %v265 = vperm.slane %v252, 2
    %277 = vmatpush.msra.mxu0 %v240
    %278 = vmatpush.msra.mxu0 %v229
    %279 = vmatpush.msra.mxu0 %v218
    %280 = vmatpush.msra.mxu0 %v207
    %281 = vmatpush.msra.mxu0 %v196
    %282 = vmatpush.msra.mxu0 %v185
    %283 = vmatpush.msra.mxu0 %v174
    %284 = vmatpush.msra.mxu0 %v163
    %285 = vmatpush.msra.mxu0 %v152
    %286 = vmatpush.msra.mxu0 %v141
    %287 = vmatpush.msra.mxu0 %v130
    %288 = vmatpush.msra.mxu0 %v119
    %289 = vmatpush.msra.mxu0 %v108
    %290 = vmatpush.msra.mxu0 %v97
    %291 = vmatpush.msra.mxu0 %v86
    %292 = vmatpush.msra.mxu0 %v75
    %293 = vmatmul.f32.gmra.mxu0 %v74
    %v294 = vpop.f32.mrf.mxu0
    %v295 = vadd.f32 %v255, %v294
    %296 = vdwg.mxu0
    %297 = vmatpush.msra.mxu0 %v241
    %298 = vmatpush.msra.mxu0 %v230
    %299 = vmatpush.msra.mxu0 %v219
    %300 = vmatpush.msra.mxu0 %v208
    %301 = vmatpush.msra.mxu0 %v197
    %302 = vmatpush.msra.mxu0 %v186
    %303 = vmatpush.msra.mxu0 %v175
    %304 = vmatpush.msra.mxu0 %v164
    %305 = vmatpush.msra.mxu0 %v153
    %306 = vmatpush.msra.mxu0 %v142
    %307 = vmatpush.msra.mxu0 %v131
    %308 = vmatpush.msra.mxu0 %v120
    %309 = vmatpush.msra.mxu0 %v109
    %310 = vmatpush.msra.mxu0 %v98
    %311 = vmatpush.msra.mxu0 %v87
    %312 = vmatpush.msra.mxu0 %v76
    %313 = vmatmul.f32.gmra.mxu0 %v74
    %v314 = vpop.f32.mrf.mxu0
    %v315 = vadd.f32 %v256, %v314
    %316 = vdwg.mxu0
    %317 = vmatpush.msra.mxu0 %v242
    %318 = vmatpush.msra.mxu0 %v231
    %319 = vmatpush.msra.mxu0 %v220
    %320 = vmatpush.msra.mxu0 %v209
    %321 = vmatpush.msra.mxu0 %v198
    %322 = vmatpush.msra.mxu0 %v187
    %323 = vmatpush.msra.mxu0 %v176
    %324 = vmatpush.msra.mxu0 %v165
    %325 = vmatpush.msra.mxu0 %v154
    %326 = vmatpush.msra.mxu0 %v143
    %327 = vmatpush.msra.mxu0 %v132
    %328 = vmatpush.msra.mxu0 %v121
    %329 = vmatpush.msra.mxu0 %v110
    %330 = vmatpush.msra.mxu0 %v99
    %331 = vmatpush.msra.mxu0 %v88
    %332 = vmatpush.msra.mxu0 %v77
    %333 = vmatmul.f32.gmra.mxu0 %v74
    %v334 = vpop.f32.mrf.mxu0
    %v335 = vadd.f32 %v257, %v334
    %336 = vdwg.mxu0
    %337 = vmatpush.msra.mxu0 %v243
    %338 = vmatpush.msra.mxu0 %v232
    %339 = vmatpush.msra.mxu0 %v221
    %340 = vmatpush.msra.mxu0 %v210
    %341 = vmatpush.msra.mxu0 %v199
    %342 = vmatpush.msra.mxu0 %v188
    %343 = vmatpush.msra.mxu0 %v177
    %344 = vmatpush.msra.mxu0 %v166
    %345 = vmatpush.msra.mxu0 %v155
    %346 = vmatpush.msra.mxu0 %v144
    %347 = vmatpush.msra.mxu0 %v133
    %348 = vmatpush.msra.mxu0 %v122
    %349 = vmatpush.msra.mxu0 %v111
    %350 = vmatpush.msra.mxu0 %v100
    %351 = vmatpush.msra.mxu0 %v89
    %352 = vmatpush.msra.mxu0 %v78
    %353 = vmatmul.f32.gmra.mxu0 %v74
    %v354 = vpop.f32.mrf.mxu0
    %v355 = vadd.f32 %v258, %v354
    %356 = vdwg.mxu0
    %357 = vmatpush.msra.mxu0 %v244
    %358 = vmatpush.msra.mxu0 %v233
    %359 = vmatpush.msra.mxu0 %v222
    %360 = vmatpush.msra.mxu0 %v211
    %361 = vmatpush.msra.mxu0 %v200
    %362 = vmatpush.msra.mxu0 %v189
    %363 = vmatpush.msra.mxu0 %v178
    %364 = vmatpush.msra.mxu0 %v167
    %365 = vmatpush.msra.mxu0 %v156
    %366 = vmatpush.msra.mxu0 %v145
    %367 = vmatpush.msra.mxu0 %v134
    %368 = vmatpush.msra.mxu0 %v123
    %369 = vmatpush.msra.mxu0 %v112
    %370 = vmatpush.msra.mxu0 %v101
    %371 = vmatpush.msra.mxu0 %v90
    %372 = vmatpush.msra.mxu0 %v79
    %373 = vmatmul.f32.gmra.mxu0 %v74
    %v374 = vpop.f32.mrf.mxu0
    %v375 = vadd.f32 %v259, %v374
    %376 = vdwg.mxu0
    %377 = vmatpush.msra.mxu0 %v245
    %378 = vmatpush.msra.mxu0 %v234
    %379 = vmatpush.msra.mxu0 %v223
    %380 = vmatpush.msra.mxu0 %v212
    %381 = vmatpush.msra.mxu0 %v201
    %382 = vmatpush.msra.mxu0 %v190
    %383 = vmatpush.msra.mxu0 %v179
    %384 = vmatpush.msra.mxu0 %v168
    %385 = vmatpush.msra.mxu0 %v157
    %386 = vmatpush.msra.mxu0 %v146
    %387 = vmatpush.msra.mxu0 %v135
    %388 = vmatpush.msra.mxu0 %v124
    %389 = vmatpush.msra.mxu0 %v113
    %390 = vmatpush.msra.mxu0 %v102
    %391 = vmatpush.msra.mxu0 %v91
    %392 = vmatpush.msra.mxu0 %v80
    %393 = vmatmul.f32.gmra.mxu0 %v74
    %v394 = vpop.f32.mrf.mxu0
    %v395 = vadd.f32 %v260, %v394
    %396 = vdwg.mxu0
    %397 = vmatpush.msra.mxu0 %v246
    %398 = vmatpush.msra.mxu0 %v235
    %399 = vmatpush.msra.mxu0 %v224
    %400 = vmatpush.msra.mxu0 %v213
    %401 = vmatpush.msra.mxu0 %v202
    %402 = vmatpush.msra.mxu0 %v191
    %403 = vmatpush.msra.mxu0 %v180
    %404 = vmatpush.msra.mxu0 %v169
    %405 = vmatpush.msra.mxu0 %v158
    %406 = vmatpush.msra.mxu0 %v147
    %407 = vmatpush.msra.mxu0 %v136
    %408 = vmatpush.msra.mxu0 %v125
    %409 = vmatpush.msra.mxu0 %v114
    %410 = vmatpush.msra.mxu0 %v103
    %411 = vmatpush.msra.mxu0 %v92
    %412 = vmatpush.msra.mxu0 %v81
    %413 = vmatmul.f32.gmra.mxu0 %v74
    %v414 = vpop.f32.mrf.mxu0
    %v415 = vadd.f32 %v261, %v414
    %416 = vdwg.mxu0
    %417 = vmatpush.msra.mxu0 %v247
    %418 = vmatpush.msra.mxu0 %v236
    %419 = vmatpush.msra.mxu0 %v225
    %420 = vmatpush.msra.mxu0 %v214
    %421 = vmatpush.msra.mxu0 %v203
    %422 = vmatpush.msra.mxu0 %v192
    %423 = vmatpush.msra.mxu0 %v181
    %424 = vmatpush.msra.mxu0 %v170
    %425 = vmatpush.msra.mxu0 %v159
    %426 = vmatpush.msra.mxu0 %v148
    %427 = vmatpush.msra.mxu0 %v137
    %428 = vmatpush.msra.mxu0 %v126
    %429 = vmatpush.msra.mxu0 %v115
    %430 = vmatpush.msra.mxu0 %v104
    %431 = vmatpush.msra.mxu0 %v93
    %432 = vmatpush.msra.mxu0 %v82
    %433 = vmatmul.f32.gmra.mxu0 %v74
    %v434 = vpop.f32.mrf.mxu0
    %v435 = vadd.f32 %v262, %v434
    %436 = vdwg.mxu0
    %437 = vmatpush.msra.mxu0 %v248
    %438 = vmatpush.msra.mxu0 %v237
    %439 = vmatpush.msra.mxu0 %v226
    %440 = vmatpush.msra.mxu0 %v215
    %441 = vmatpush.msra.mxu0 %v204
    %442 = vmatpush.msra.mxu0 %v193
    %443 = vmatpush.msra.mxu0 %v182
    %444 = vmatpush.msra.mxu0 %v171
    %445 = vmatpush.msra.mxu0 %v160
    %446 = vmatpush.msra.mxu0 %v149
    %447 = vmatpush.msra.mxu0 %v138
    %448 = vmatpush.msra.mxu0 %v127
    %449 = vmatpush.msra.mxu0 %v116
    %450 = vmatpush.msra.mxu0 %v105
    %451 = vmatpush.msra.mxu0 %v94
    %452 = vmatpush.msra.mxu0 %v83
    %453 = vmatmul.f32.gmra.mxu0 %v74
    %v454 = vpop.f32.mrf.mxu0
    %v455 = vadd.f32 %v263, %v454
    %456 = vdwg.mxu0
    %457 = vmatpush.msra.mxu0 %v249
    %458 = vmatpush.msra.mxu0 %v238
    %459 = vmatpush.msra.mxu0 %v227
    %460 = vmatpush.msra.mxu0 %v216
    %461 = vmatpush.msra.mxu0 %v205
    %462 = vmatpush.msra.mxu0 %v194
    %463 = vmatpush.msra.mxu0 %v183
    %464 = vmatpush.msra.mxu0 %v172
    %465 = vmatpush.msra.mxu0 %v161
    %466 = vmatpush.msra.mxu0 %v150
    %467 = vmatpush.msra.mxu0 %v139
    %468 = vmatpush.msra.mxu0 %v128
    %469 = vmatpush.msra.mxu0 %v117
    %470 = vmatpush.msra.mxu0 %v106
    %471 = vmatpush.msra.mxu0 %v95
    %472 = vmatpush.msra.mxu0 %v84
    %473 = vmatmul.f32.gmra.mxu0 %v74
    %v474 = vpop.f32.mrf.mxu0
    %v475 = vadd.f32 %v264, %v474
    %476 = vdwg.mxu0
    %477 = vmatpush.msra.mxu0 %v250
    %478 = vmatpush.msra.mxu0 %v239
    %479 = vmatpush.msra.mxu0 %v228
    %480 = vmatpush.msra.mxu0 %v217
    %481 = vmatpush.msra.mxu0 %v206
    %482 = vmatpush.msra.mxu0 %v195
    %483 = vmatpush.msra.mxu0 %v184
    %484 = vmatpush.msra.mxu0 %v173
    %485 = vmatpush.msra.mxu0 %v162
    %486 = vmatpush.msra.mxu0 %v151
    %487 = vmatpush.msra.mxu0 %v140
    %488 = vmatpush.msra.mxu0 %v129
    %489 = vmatpush.msra.mxu0 %v118
    %490 = vmatpush.msra.mxu0 %v107
    %491 = vmatpush.msra.mxu0 %v96
    %492 = vmatpush.msra.mxu0 %v85
    %493 = vmatmul.f32.gmra.mxu0 %v74
    %v494 = vpop.f32.mrf.mxu0
    %v495 = vadd.f32 %v265, %v494
    %496 = vdwg.mxu0
    %v497 = vld [vmem:[%s7] sm:$0xff]
    %v498 = vld [vmem:[%s7 + $0x8] sm:$0xff]
    %v499 = vld [vmem:[%s7 + $0x10] sm:$0xff]
    %v500 = vld [vmem:[%s7 + $0x18] sm:$0xff]
    %v501 = vld [vmem:[%s7 + $0x20] sm:$0xff]
    %v502 = vld [vmem:[%s7 + $0x28] sm:$0xff]
    %v503 = vld [vmem:[%s7 + $0x30] sm:$0xff]
    %v504 = vld [vmem:[%s7 + $0x38] sm:$0xff]
    %v505 = vld [vmem:[%s7 + $0x40] sm:$0xff]
    %v506 = vld [vmem:[%s7 + $0x48] sm:$0xff]
    %v507 = vld [vmem:[%s7 + $0x50] sm:$0xff]
    %v508 = vld [vmem:[%s7 + $0x58] sm:$0xff]
    %v509 = vld [vmem:[%s7 + $0x60] sm:$0x7f]
    %v510 = vld [vmem:[%s7 + $0x68] sm:$0x7f]
    %v511 = vld [vmem:[%s7 + $0x70] sm:$0x7f]
    %vm512 = vcmask 318464
    %v514 = vsel %vm512, %v38, 0
    %vm516 = vcmask 1046528
    %v518 = vsel %vm516, %v509, 0
    %v521 = vsel %vm516, %v510, 0
    %v524 = vsel %vm516, %v511, 0
    %526 = vmatpush.msra.mxu0 0.0
    %527 = vmatpush.msra.mxu0 0.0
    %528 = vmatpush.msra.mxu0 0.0
    %529 = vmatpush.msra.mxu0 0.0
    %530 = vmatpush.msra.mxu0 0.0
    %531 = vmatpush.msra.mxu0 0.0
    %532 = vmatpush.msra.mxu0 0.0
    %533 = vmatpush.msra.mxu0 0.0
    %534 = vmatpush.msra.mxu0 0.0
    %535 = vmatpush.msra.mxu0 0.0
    %536 = vmatpush.msra.mxu0 0.0
    %537 = vmatpush.msra.mxu0 %v518
    %538 = vmatpush.msra.mxu0 %v506
    %539 = vmatpush.msra.mxu0 %v503
    %540 = vmatpush.msra.mxu0 %v500
    %541 = vmatpush.msra.mxu0 %v497
    %542 = vmatmul.f32.gmra.mxu0 %v514
    %v543 = vpop.f32.mrf.mxu0
    %v544 = vadd.f32 0.0, %v543
    %545 = vdwg.mxu0
    %546 = vmatpush.msra.mxu0 0.0
    %547 = vmatpush.msra.mxu0 0.0
    %548 = vmatpush.msra.mxu0 0.0
    %549 = vmatpush.msra.mxu0 0.0
    %550 = vmatpush.msra.mxu0 0.0
    %551 = vmatpush.msra.mxu0 0.0
    %552 = vmatpush.msra.mxu0 0.0
    %553 = vmatpush.msra.mxu0 0.0
    %554 = vmatpush.msra.mxu0 0.0
    %555 = vmatpush.msra.mxu0 0.0
    %556 = vmatpush.msra.mxu0 0.0
    %557 = vmatpush.msra.mxu0 %v521
    %558 = vmatpush.msra.mxu0 %v507
    %559 = vmatpush.msra.mxu0 %v504
    %560 = vmatpush.msra.mxu0 %v501
    %561 = vmatpush.msra.mxu0 %v498
    %562 = vmatmul.f32.gmra.mxu0 %v514
    %v563 = vpop.f32.mrf.mxu0
    %v564 = vadd.f32 0.0, %v563
    %565 = vdwg.mxu0
    %566 = vmatpush.msra.mxu0 0.0
    %567 = vmatpush.msra.mxu0 0.0
    %568 = vmatpush.msra.mxu0 0.0
    %569 = vmatpush.msra.mxu0 0.0
    %570 = vmatpush.msra.mxu0 0.0
    %571 = vmatpush.msra.mxu0 0.0
    %572 = vmatpush.msra.mxu0 0.0
    %573 = vmatpush.msra.mxu0 0.0
    %574 = vmatpush.msra.mxu0 0.0
    %575 = vmatpush.msra.mxu0 0.0
    %576 = vmatpush.msra.mxu0 0.0
    %577 = vmatpush.msra.mxu0 %v524
    %578 = vmatpush.msra.mxu0 %v508
    %579 = vmatpush.msra.mxu0 %v505
    %580 = vmatpush.msra.mxu0 %v502
    %581 = vmatpush.msra.mxu0 %v499
    %582 = vmatmul.f32.gmra.mxu0 %v514
    %v583 = vpop.f32.mrf.mxu0
    %v584 = vadd.f32 0.0, %v583
    %585 = vdwg.mxu0
    %v586 = vlaneseq
    %v587 = vand.u32 %v586, 127
    %v588 = vadd.s32 %v587, 128
    %v589 = vadd.s32 %v587, 256
    %v590 = vcvt.s32.f32 %v587
    %v591 = vcvt.s32.f32 %v588
    %v592 = vcvt.s32.f32 %v589
    %v593 = vsub.f32 %v544, %v590
    %v594 = vsub.f32 %v564, %v591
    %v595 = vsub.f32 %v584, %v592
    %v596 = vand.u32 2147483647, %v593
    %v597 = vand.u32 2147483647, %v594
    %v598 = vand.u32 2147483647, %v595
    %vm599 = vcmp.lt.f32.partialorder %v596, 0.5
    %vm600 = vcmp.lt.f32.partialorder %v597, 0.5
    %vm601 = vcmp.lt.f32.partialorder %v598, 0.5
    %v602 = vsel %vm599, 1, 0
    %v603 = vsel %vm600, 1, 0
    %v604 = vsel %vm601, 1, 0
    %v605 = vcvt.s32.f32 %v602
    %v606 = vcvt.s32.f32 %v603
    %v607 = vcvt.s32.f32 %v604
    %v608 = vld [vmem:[%s8] sm:$0xff]
    %v609 = vld [vmem:[%s8 + $0x8] sm:$0xff]
    %v610 = vld [vmem:[%s8 + $0x10] sm:$0xff]
    %v611 = vld [vmem:[%s8 + $0x18] sm:$0xff]
    %v612 = vld [vmem:[%s8 + $0x20] sm:$0xff]
    %v613 = vld [vmem:[%s8 + $0x28] sm:$0xff]
    %v614 = vld [vmem:[%s8 + $0x30] sm:$0xff]
    %v615 = vld [vmem:[%s8 + $0x38] sm:$0xff]
    %v616 = vld [vmem:[%s8 + $0x40] sm:$0xff]
    %v617 = vld [vmem:[%s8 + $0x48] sm:$0xff]
    %v618 = vld [vmem:[%s8 + $0x50] sm:$0xff]
    %v619 = vld [vmem:[%s8 + $0x58] sm:$0xff]
    %v620 = vld [vmem:[%s8 + $0x60] sm:$0xff]
    %v621 = vld [vmem:[%s8 + $0x68] sm:$0xff]
    %v622 = vld [vmem:[%s8 + $0x70] sm:$0xff]
    %v623 = vld [vmem:[%s8 + $0x78] sm:$0xff]
    %v624 = vld [vmem:[%s8 + $0x80] sm:$0xff]
    %v625 = vld [vmem:[%s8 + $0x88] sm:$0xff]
    %v626 = vld [vmem:[%s8 + $0x90] sm:$0xff]
    %v627 = vld [vmem:[%s8 + $0x98] sm:$0xff]
    %v628 = vld [vmem:[%s8 + $0xa0] sm:$0xff]
    %v629 = vld [vmem:[%s8 + $0xa8] sm:$0xff]
    %v630 = vld [vmem:[%s8 + $0xb0] sm:$0xff]
    %v631 = vld [vmem:[%s8 + $0xb8] sm:$0xff]
    %v632 = vld [vmem:[%s8 + $0xc0] sm:$0xff]
    %v633 = vld [vmem:[%s8 + $0xc8] sm:$0xff]
    %v634 = vld [vmem:[%s8 + $0xd0] sm:$0xff]
    %v635 = vld [vmem:[%s8 + $0xd8] sm:$0xff]
    %v636 = vld [vmem:[%s8 + $0xe0] sm:$0xff]
    %v637 = vld [vmem:[%s8 + $0xe8] sm:$0xff]
    %v638 = vld [vmem:[%s8 + $0xf0] sm:$0xff]
    %v639 = vld [vmem:[%s8 + $0xf8] sm:$0xff]
    %v640 = vld [vmem:[%s8 + $0x100] sm:$0xff]
    %v641 = vld [vmem:[%s8 + $0x108] sm:$0xff]
    %v642 = vld [vmem:[%s8 + $0x110] sm:$0xff]
    %v643 = vld [vmem:[%s8 + $0x118] sm:$0xff]
    %v644 = vld [vmem:[%s8 + $0x120] sm:$0xff]
    %v645 = vld [vmem:[%s8 + $0x128] sm:$0xff]
    %v646 = vld [vmem:[%s8 + $0x130] sm:$0xff]
    %v647 = vld [vmem:[%s8 + $0x138] sm:$0xff]
    %v648 = vld [vmem:[%s8 + $0x140] sm:$0xff]
    %v649 = vld [vmem:[%s8 + $0x148] sm:$0xff]
    %v650 = vld [vmem:[%s8 + $0x150] sm:$0xff]
    %v651 = vld [vmem:[%s8 + $0x158] sm:$0xff]
    %v652 = vld [vmem:[%s8 + $0x160] sm:$0xff]
    %v653 = vld [vmem:[%s8 + $0x168] sm:$0xff]
    %v654 = vld [vmem:[%s8 + $0x170] sm:$0xff]
    %v655 = vld [vmem:[%s8 + $0x178] sm:$0xff]
    %v656 = vld [vmem:[%s8 + $0x180] sm:$0xff]
    %v657 = vld [vmem:[%s8 + $0x188] sm:$0xff]
    %v658 = vld [vmem:[%s8 + $0x190] sm:$0xff]
    %v659 = vld [vmem:[%s8 + $0x198] sm:$0xff]
    %v660 = vld [vmem:[%s8 + $0x1a0] sm:$0xff]
    %v661 = vld [vmem:[%s8 + $0x1a8] sm:$0xff]
    %v662 = vld [vmem:[%s8 + $0x1b0] sm:$0xff]
    %v663 = vld [vmem:[%s8 + $0x1b8] sm:$0xff]
    %v664 = vld [vmem:[%s8 + $0x1c0] sm:$0xff]
    %v665 = vld [vmem:[%s8 + $0x1c8] sm:$0xff]
    %v666 = vld [vmem:[%s8 + $0x1d0] sm:$0xff]
    %v667 = vld [vmem:[%s8 + $0x1d8] sm:$0xff]
    %v668 = vld [vmem:[%s8 + $0x1e0] sm:$0xff]
    %v669 = vld [vmem:[%s8 + $0x1e8] sm:$0xff]
    %v670 = vld [vmem:[%s8 + $0x1f0] sm:$0xff]
    %v671 = vld [vmem:[%s8 + $0x1f8] sm:$0xff]
    %v672 = vld [vmem:[%s8 + $0x200] sm:$0xff]
    %v673 = vld [vmem:[%s8 + $0x208] sm:$0xff]
    %v674 = vld [vmem:[%s8 + $0x210] sm:$0xff]
    %v675 = vld [vmem:[%s8 + $0x218] sm:$0xff]
    %v676 = vld [vmem:[%s8 + $0x220] sm:$0xff]
    %v677 = vld [vmem:[%s8 + $0x228] sm:$0xff]
    %v678 = vld [vmem:[%s8 + $0x230] sm:$0xff]
    %v679 = vld [vmem:[%s8 + $0x238] sm:$0xff]
    %v680 = vld [vmem:[%s8 + $0x240] sm:$0xff]
    %v681 = vld [vmem:[%s8 + $0x248] sm:$0xff]
    %v682 = vld [vmem:[%s8 + $0x250] sm:$0xff]
    %v683 = vld [vmem:[%s8 + $0x258] sm:$0xff]
    %v684 = vld [vmem:[%s8 + $0x260] sm:$0xff]
    %v685 = vld [vmem:[%s8 + $0x268] sm:$0xff]
    %v686 = vld [vmem:[%s8 + $0x270] sm:$0xff]
    %v687 = vld [vmem:[%s8 + $0x278] sm:$0xff]
    %v688 = vld [vmem:[%s8 + $0x280] sm:$0xff]
    %v689 = vld [vmem:[%s8 + $0x288] sm:$0xff]
    %v690 = vld [vmem:[%s8 + $0x290] sm:$0xff]
    %v691 = vld [vmem:[%s8 + $0x298] sm:$0xff]
    %v692 = vld [vmem:[%s8 + $0x2a0] sm:$0xff]
    %v693 = vld [vmem:[%s8 + $0x2a8] sm:$0xff]
    %v694 = vld [vmem:[%s8 + $0x2b0] sm:$0xff]
    %v695 = vld [vmem:[%s8 + $0x2b8] sm:$0xff]
    %v696 = vld [vmem:[%s8 + $0x2c0] sm:$0xff]
    %v697 = vld [vmem:[%s8 + $0x2c8] sm:$0xff]
    %v698 = vld [vmem:[%s8 + $0x2d0] sm:$0xff]
    %v699 = vld [vmem:[%s8 + $0x2d8] sm:$0xff]
    %v700 = vld [vmem:[%s8 + $0x2e0] sm:$0xff]
    %v701 = vld [vmem:[%s8 + $0x2e8] sm:$0xff]
    %v702 = vld [vmem:[%s8 + $0x2f0] sm:$0xff]
    %v703 = vld [vmem:[%s8 + $0x2f8] sm:$0xff]
    %v704 = vld [vmem:[%s8 + $0x300] sm:$0xff]
    %v705 = vld [vmem:[%s8 + $0x308] sm:$0xff]
    %v706 = vld [vmem:[%s8 + $0x310] sm:$0xff]
    %v707 = vld [vmem:[%s8 + $0x318] sm:$0xff]
    %v708 = vld [vmem:[%s8 + $0x320] sm:$0xff]
    %v709 = vld [vmem:[%s8 + $0x328] sm:$0xff]
    %v710 = vld [vmem:[%s8 + $0x330] sm:$0xff]
    %v711 = vld [vmem:[%s8 + $0x338] sm:$0xff]
    %v712 = vld [vmem:[%s8 + $0x340] sm:$0xff]
    %v713 = vld [vmem:[%s8 + $0x348] sm:$0xff]
    %v714 = vld [vmem:[%s8 + $0x350] sm:$0xff]
    %v715 = vld [vmem:[%s8 + $0x358] sm:$0xff]
    %v716 = vld [vmem:[%s8 + $0x360] sm:$0xff]
    %v717 = vld [vmem:[%s8 + $0x368] sm:$0xff]
    %v718 = vld [vmem:[%s8 + $0x370] sm:$0xff]
    %v719 = vld [vmem:[%s8 + $0x378] sm:$0xff]
    %v720 = vld [vmem:[%s8 + $0x380] sm:$0xff]
    %v721 = vld [vmem:[%s8 + $0x388] sm:$0xff]
    %v722 = vld [vmem:[%s8 + $0x390] sm:$0xff]
    %v723 = vld [vmem:[%s8 + $0x398] sm:$0xff]
    %v724 = vld [vmem:[%s8 + $0x3a0] sm:$0xff]
    %v725 = vld [vmem:[%s8 + $0x3a8] sm:$0xff]
    %v726 = vld [vmem:[%s8 + $0x3b0] sm:$0xff]
    %v727 = vld [vmem:[%s8 + $0x3b8] sm:$0xff]
    %v728 = vld [vmem:[%s8 + $0x3c0] sm:$0xff]
    %v729 = vld [vmem:[%s8 + $0x3c8] sm:$0xff]
    %v730 = vld [vmem:[%s8 + $0x3d0] sm:$0xff]
    %v731 = vld [vmem:[%s8 + $0x3d8] sm:$0xff]
    %v732 = vld [vmem:[%s8 + $0x3e0] sm:$0xff]
    %v733 = vld [vmem:[%s8 + $0x3e8] sm:$0xff]
    %v734 = vld [vmem:[%s8 + $0x3f0] sm:$0xff]
    %v735 = vld [vmem:[%s8 + $0x3f8] sm:$0xff]
    %v736 = vld [vmem:[%s8 + $0x400] sm:$0xff]
    %v737 = vld [vmem:[%s8 + $0x408] sm:$0xff]
    %v738 = vld [vmem:[%s8 + $0x410] sm:$0xff]
    %v739 = vld [vmem:[%s8 + $0x418] sm:$0xff]
    %v740 = vld [vmem:[%s8 + $0x420] sm:$0xff]
    %v741 = vld [vmem:[%s8 + $0x428] sm:$0xff]
    %v742 = vld [vmem:[%s8 + $0x430] sm:$0xff]
    %v743 = vld [vmem:[%s8 + $0x438] sm:$0xff]
    %v744 = vld [vmem:[%s8 + $0x440] sm:$0xff]
    %v745 = vld [vmem:[%s8 + $0x448] sm:$0xff]
    %v746 = vld [vmem:[%s8 + $0x450] sm:$0xff]
    %v747 = vld [vmem:[%s8 + $0x458] sm:$0xff]
    %v748 = vld [vmem:[%s8 + $0x460] sm:$0xff]
    %v749 = vld [vmem:[%s8 + $0x468] sm:$0xff]
    %v750 = vld [vmem:[%s8 + $0x470] sm:$0xff]
    %v751 = vld [vmem:[%s8 + $0x478] sm:$0xff]
    %v752 = vld [vmem:[%s8 + $0x480] sm:$0xff]
    %v753 = vld [vmem:[%s8 + $0x488] sm:$0xff]
    %v754 = vld [vmem:[%s8 + $0x490] sm:$0xff]
    %v755 = vld [vmem:[%s8 + $0x498] sm:$0xff]
    %v756 = vld [vmem:[%s8 + $0x4a0] sm:$0xff]
    %v757 = vld [vmem:[%s8 + $0x4a8] sm:$0xff]
    %v758 = vld [vmem:[%s8 + $0x4b0] sm:$0xff]
    %v759 = vld [vmem:[%s8 + $0x4b8] sm:$0xff]
    %v760 = vld [vmem:[%s8 + $0x4c0] sm:$0xff]
    %v761 = vld [vmem:[%s8 + $0x4c8] sm:$0xff]
    %v762 = vld [vmem:[%s8 + $0x4d0] sm:$0xff]
    %v763 = vld [vmem:[%s8 + $0x4d8] sm:$0xff]
    %v764 = vld [vmem:[%s8 + $0x4e0] sm:$0xff]
    %v765 = vld [vmem:[%s8 + $0x4e8] sm:$0xff]
    %v766 = vld [vmem:[%s8 + $0x4f0] sm:$0xff]
    %v767 = vld [vmem:[%s8 + $0x4f8] sm:$0xff]
    %v768 = vld [vmem:[%s8 + $0x500] sm:$0xff]
    %v769 = vld [vmem:[%s8 + $0x508] sm:$0xff]
    %v770 = vld [vmem:[%s8 + $0x510] sm:$0xff]
    %v771 = vld [vmem:[%s8 + $0x518] sm:$0xff]
    %v772 = vld [vmem:[%s8 + $0x520] sm:$0xff]
    %v773 = vld [vmem:[%s8 + $0x528] sm:$0xff]
    %v774 = vld [vmem:[%s8 + $0x530] sm:$0xff]
    %v775 = vld [vmem:[%s8 + $0x538] sm:$0xff]
    %v776 = vld [vmem:[%s8 + $0x540] sm:$0xff]
    %v777 = vld [vmem:[%s8 + $0x548] sm:$0xff]
    %v778 = vld [vmem:[%s8 + $0x550] sm:$0xff]
    %v779 = vld [vmem:[%s8 + $0x558] sm:$0xff]
    %v780 = vld [vmem:[%s8 + $0x560] sm:$0xff]
    %v781 = vld [vmem:[%s8 + $0x568] sm:$0xff]
    %v782 = vld [vmem:[%s8 + $0x570] sm:$0xff]
    %v783 = vld [vmem:[%s8 + $0x578] sm:$0xff]
    %v784 = vld [vmem:[%s8 + $0x580] sm:$0xff]
    %v785 = vld [vmem:[%s8 + $0x588] sm:$0xff]
    %v786 = vld [vmem:[%s8 + $0x590] sm:$0xff]
    %v787 = vld [vmem:[%s8 + $0x598] sm:$0xff]
    %v788 = vld [vmem:[%s8 + $0x5a0] sm:$0xff]
    %v789 = vld [vmem:[%s8 + $0x5a8] sm:$0xff]
    %v790 = vld [vmem:[%s8 + $0x5b0] sm:$0xff]
    %v791 = vld [vmem:[%s8 + $0x5b8] sm:$0xff]
    %v792 = vld [vmem:[%s8 + $0x5c0] sm:$0xff]
    %v793 = vld [vmem:[%s8 + $0x5c8] sm:$0xff]
    %v794 = vld [vmem:[%s8 + $0x5d0] sm:$0xff]
    %v795 = vld [vmem:[%s8 + $0x5d8] sm:$0xff]
    %v796 = vld [vmem:[%s8 + $0x5e0] sm:$0xff]
    %v797 = vld [vmem:[%s8 + $0x5e8] sm:$0xff]
    %v798 = vld [vmem:[%s8 + $0x5f0] sm:$0xff]
    %v799 = vld [vmem:[%s8 + $0x5f8] sm:$0xff]
    %v800 = vld [vmem:[%s8 + $0x600] sm:$0xff]
    %v801 = vld [vmem:[%s8 + $0x608] sm:$0xff]
    %v802 = vld [vmem:[%s8 + $0x610] sm:$0xff]
    %v803 = vld [vmem:[%s8 + $0x618] sm:$0xff]
    %v804 = vld [vmem:[%s8 + $0x620] sm:$0xff]
    %v805 = vld [vmem:[%s8 + $0x628] sm:$0xff]
    %v806 = vld [vmem:[%s8 + $0x630] sm:$0xff]
    %v807 = vld [vmem:[%s8 + $0x638] sm:$0xff]
    %v808 = vld [vmem:[%s8 + $0x640] sm:$0xff]
    %v809 = vld [vmem:[%s8 + $0x648] sm:$0xff]
    %v810 = vld [vmem:[%s8 + $0x650] sm:$0xff]
    %v811 = vld [vmem:[%s8 + $0x658] sm:$0xff]
    %v812 = vld [vmem:[%s8 + $0x660] sm:$0xff]
    %v813 = vld [vmem:[%s8 + $0x668] sm:$0xff]
    %v814 = vld [vmem:[%s8 + $0x670] sm:$0xff]
    %v815 = vld [vmem:[%s8 + $0x678] sm:$0xff]
    %v816 = vld [vmem:[%s8 + $0x680] sm:$0xff]
    %v817 = vld [vmem:[%s8 + $0x688] sm:$0xff]
    %v818 = vld [vmem:[%s8 + $0x690] sm:$0xff]
    %v819 = vld [vmem:[%s8 + $0x698] sm:$0xff]
    %v820 = vld [vmem:[%s8 + $0x6a0] sm:$0xff]
    %v821 = vld [vmem:[%s8 + $0x6a8] sm:$0xff]
    %v822 = vld [vmem:[%s8 + $0x6b0] sm:$0xff]
    %v823 = vld [vmem:[%s8 + $0x6b8] sm:$0xff]
    %v824 = vld [vmem:[%s8 + $0x6c0] sm:$0xff]
    %v825 = vld [vmem:[%s8 + $0x6c8] sm:$0xff]
    %v826 = vld [vmem:[%s8 + $0x6d0] sm:$0xff]
    %v827 = vld [vmem:[%s8 + $0x6d8] sm:$0xff]
    %v828 = vld [vmem:[%s8 + $0x6e0] sm:$0xff]
    %v829 = vld [vmem:[%s8 + $0x6e8] sm:$0xff]
    %v830 = vld [vmem:[%s8 + $0x6f0] sm:$0xff]
    %v831 = vld [vmem:[%s8 + $0x6f8] sm:$0xff]
    %v832 = vld [vmem:[%s8 + $0x700] sm:$0xff]
    %v833 = vld [vmem:[%s8 + $0x708] sm:$0xff]
    %v834 = vld [vmem:[%s8 + $0x710] sm:$0xff]
    %v835 = vld [vmem:[%s8 + $0x718] sm:$0xff]
    %v836 = vld [vmem:[%s8 + $0x720] sm:$0xff]
    %v837 = vld [vmem:[%s8 + $0x728] sm:$0xff]
    %v838 = vld [vmem:[%s8 + $0x730] sm:$0xff]
    %v839 = vld [vmem:[%s8 + $0x738] sm:$0xff]
    %v840 = vld [vmem:[%s8 + $0x740] sm:$0xff]
    %v841 = vld [vmem:[%s8 + $0x748] sm:$0xff]
    %v842 = vld [vmem:[%s8 + $0x750] sm:$0xff]
    %v843 = vld [vmem:[%s8 + $0x758] sm:$0xff]
    %v844 = vld [vmem:[%s8 + $0x760] sm:$0xff]
    %v845 = vld [vmem:[%s8 + $0x768] sm:$0xff]
    %v846 = vld [vmem:[%s8 + $0x770] sm:$0xff]
    %v847 = vld [vmem:[%s8 + $0x778] sm:$0xff]
    %v848 = vld [vmem:[%s8 + $0x780] sm:$0xff]
    %v849 = vld [vmem:[%s8 + $0x788] sm:$0xff]
    %v850 = vld [vmem:[%s8 + $0x790] sm:$0xff]
    %v851 = vld [vmem:[%s8 + $0x798] sm:$0xff]
    %v852 = vld [vmem:[%s8 + $0x7a0] sm:$0xff]
    %v853 = vld [vmem:[%s8 + $0x7a8] sm:$0xff]
    %v854 = vld [vmem:[%s8 + $0x7b0] sm:$0xff]
    %v855 = vld [vmem:[%s8 + $0x7b8] sm:$0xff]
    %v856 = vld [vmem:[%s8 + $0x7c0] sm:$0xff]
    %v857 = vld [vmem:[%s8 + $0x7c8] sm:$0xff]
    %v858 = vld [vmem:[%s8 + $0x7d0] sm:$0xff]
    %v859 = vld [vmem:[%s8 + $0x7d8] sm:$0xff]
    %v860 = vld [vmem:[%s8 + $0x7e0] sm:$0xff]
    %v861 = vld [vmem:[%s8 + $0x7e8] sm:$0xff]
    %v862 = vld [vmem:[%s8 + $0x7f0] sm:$0xff]
    %v863 = vld [vmem:[%s8 + $0x7f8] sm:$0xff]
    %v864 = vld [vmem:[%s8 + $0x800] sm:$0xff]
    %v865 = vld [vmem:[%s8 + $0x808] sm:$0xff]
    %v866 = vld [vmem:[%s8 + $0x810] sm:$0xff]
    %v867 = vld [vmem:[%s8 + $0x818] sm:$0xff]
    %v868 = vld [vmem:[%s8 + $0x820] sm:$0xff]
    %v869 = vld [vmem:[%s8 + $0x828] sm:$0xff]
    %v870 = vld [vmem:[%s8 + $0x830] sm:$0xff]
    %v871 = vld [vmem:[%s8 + $0x838] sm:$0xff]
    %v872 = vld [vmem:[%s8 + $0x840] sm:$0xff]
    %v873 = vld [vmem:[%s8 + $0x848] sm:$0xff]
    %v874 = vld [vmem:[%s8 + $0x850] sm:$0xff]
    %v875 = vld [vmem:[%s8 + $0x858] sm:$0xff]
    %v876 = vld [vmem:[%s8 + $0x860] sm:$0xff]
    %v877 = vld [vmem:[%s8 + $0x868] sm:$0xff]
    %v878 = vld [vmem:[%s8 + $0x870] sm:$0xff]
    %v879 = vld [vmem:[%s8 + $0x878] sm:$0xff]
    %v880 = vld [vmem:[%s8 + $0x880] sm:$0xff]
    %v881 = vld [vmem:[%s8 + $0x888] sm:$0xff]
    %v882 = vld [vmem:[%s8 + $0x890] sm:$0xff]
    %v883 = vld [vmem:[%s8 + $0x898] sm:$0xff]
    %v884 = vld [vmem:[%s8 + $0x8a0] sm:$0xff]
    %v885 = vld [vmem:[%s8 + $0x8a8] sm:$0xff]
    %v886 = vld [vmem:[%s8 + $0x8b0] sm:$0xff]
    %v887 = vld [vmem:[%s8 + $0x8b8] sm:$0xff]
    %v888 = vld [vmem:[%s8 + $0x8c0] sm:$0xff]
    %v889 = vld [vmem:[%s8 + $0x8c8] sm:$0xff]
    %v890 = vld [vmem:[%s8 + $0x8d0] sm:$0xff]
    %v891 = vld [vmem:[%s8 + $0x8d8] sm:$0xff]
    %v892 = vld [vmem:[%s8 + $0x8e0] sm:$0xff]
    %v893 = vld [vmem:[%s8 + $0x8e8] sm:$0xff]
    %v894 = vld [vmem:[%s8 + $0x8f0] sm:$0xff]
    %v895 = vld [vmem:[%s8 + $0x8f8] sm:$0xff]
    %v896 = vld [vmem:[%s8 + $0x900] sm:$0xff]
    %v897 = vld [vmem:[%s8 + $0x908] sm:$0xff]
    %v898 = vld [vmem:[%s8 + $0x910] sm:$0xff]
    %v899 = vld [vmem:[%s8 + $0x918] sm:$0xff]
    %v900 = vld [vmem:[%s8 + $0x920] sm:$0xff]
    %v901 = vld [vmem:[%s8 + $0x928] sm:$0xff]
    %v902 = vld [vmem:[%s8 + $0x930] sm:$0xff]
    %v903 = vld [vmem:[%s8 + $0x938] sm:$0xff]
    %v904 = vld [vmem:[%s8 + $0x940] sm:$0xff]
    %v905 = vld [vmem:[%s8 + $0x948] sm:$0xff]
    %v906 = vld [vmem:[%s8 + $0x950] sm:$0xff]
    %v907 = vld [vmem:[%s8 + $0x958] sm:$0xff]
    %v908 = vld [vmem:[%s8 + $0x960] sm:$0xff]
    %v909 = vld [vmem:[%s8 + $0x968] sm:$0xff]
    %v910 = vld [vmem:[%s8 + $0x970] sm:$0xff]
    %v911 = vld [vmem:[%s8 + $0x978] sm:$0xff]
    %v912 = vld [vmem:[%s8 + $0x980] sm:$0xff]
    %v913 = vld [vmem:[%s8 + $0x988] sm:$0xff]
    %v914 = vld [vmem:[%s8 + $0x990] sm:$0xff]
    %v915 = vld [vmem:[%s8 + $0x998] sm:$0xff]
    %v916 = vld [vmem:[%s8 + $0x9a0] sm:$0xff]
    %v917 = vld [vmem:[%s8 + $0x9a8] sm:$0xff]
    %v918 = vld [vmem:[%s8 + $0x9b0] sm:$0xff]
    %v919 = vld [vmem:[%s8 + $0x9b8] sm:$0xff]
    %v920 = vld [vmem:[%s8 + $0x9c0] sm:$0xff]
    %v921 = vld [vmem:[%s8 + $0x9c8] sm:$0xff]
    %v922 = vld [vmem:[%s8 + $0x9d0] sm:$0xff]
    %v923 = vld [vmem:[%s8 + $0x9d8] sm:$0xff]
    %v924 = vld [vmem:[%s8 + $0x9e0] sm:$0xff]
    %v925 = vld [vmem:[%s8 + $0x9e8] sm:$0xff]
    %v926 = vld [vmem:[%s8 + $0x9f0] sm:$0xff]
    %v927 = vld [vmem:[%s8 + $0x9f8] sm:$0xff]
    %v928 = vld [vmem:[%s8 + $0xa00] sm:$0xff]
    %v929 = vld [vmem:[%s8 + $0xa08] sm:$0xff]
    %v930 = vld [vmem:[%s8 + $0xa10] sm:$0xff]
    %v931 = vld [vmem:[%s8 + $0xa18] sm:$0xff]
    %v932 = vld [vmem:[%s8 + $0xa20] sm:$0xff]
    %v933 = vld [vmem:[%s8 + $0xa28] sm:$0xff]
    %v934 = vld [vmem:[%s8 + $0xa30] sm:$0xff]
    %v935 = vld [vmem:[%s8 + $0xa38] sm:$0xff]
    %v936 = vld [vmem:[%s8 + $0xa40] sm:$0xff]
    %v937 = vld [vmem:[%s8 + $0xa48] sm:$0xff]
    %v938 = vld [vmem:[%s8 + $0xa50] sm:$0xff]
    %v939 = vld [vmem:[%s8 + $0xa58] sm:$0xff]
    %v940 = vld [vmem:[%s8 + $0xa60] sm:$0xff]
    %v941 = vld [vmem:[%s8 + $0xa68] sm:$0xff]
    %v942 = vld [vmem:[%s8 + $0xa70] sm:$0xff]
    %v943 = vld [vmem:[%s8 + $0xa78] sm:$0xff]
    %v944 = vld [vmem:[%s8 + $0xa80] sm:$0xff]
    %v945 = vld [vmem:[%s8 + $0xa88] sm:$0xff]
    %v946 = vld [vmem:[%s8 + $0xa90] sm:$0xff]
    %v947 = vld [vmem:[%s8 + $0xa98] sm:$0xff]
    %v948 = vld [vmem:[%s8 + $0xaa0] sm:$0xff]
    %v949 = vld [vmem:[%s8 + $0xaa8] sm:$0xff]
    %v950 = vld [vmem:[%s8 + $0xab0] sm:$0xff]
    %v951 = vld [vmem:[%s8 + $0xab8] sm:$0xff]
    %v952 = vld [vmem:[%s8 + $0xac0] sm:$0xff]
    %v953 = vld [vmem:[%s8 + $0xac8] sm:$0xff]
    %v954 = vld [vmem:[%s8 + $0xad0] sm:$0xff]
    %v955 = vld [vmem:[%s8 + $0xad8] sm:$0xff]
    %v956 = vld [vmem:[%s8 + $0xae0] sm:$0xff]
    %v957 = vld [vmem:[%s8 + $0xae8] sm:$0xff]
    %v958 = vld [vmem:[%s8 + $0xaf0] sm:$0xff]
    %v959 = vld [vmem:[%s8 + $0xaf8] sm:$0xff]
    %v960 = vld [vmem:[%s8 + $0xb00] sm:$0xff]
    %v961 = vld [vmem:[%s8 + $0xb08] sm:$0xff]
    %v962 = vld [vmem:[%s8 + $0xb10] sm:$0xff]
    %v963 = vld [vmem:[%s8 + $0xb18] sm:$0xff]
    %v964 = vld [vmem:[%s8 + $0xb20] sm:$0xff]
    %v965 = vld [vmem:[%s8 + $0xb28] sm:$0xff]
    %v966 = vld [vmem:[%s8 + $0xb30] sm:$0xff]
    %v967 = vld [vmem:[%s8 + $0xb38] sm:$0xff]
    %v968 = vld [vmem:[%s8 + $0xb40] sm:$0xff]
    %v969 = vld [vmem:[%s8 + $0xb48] sm:$0xff]
    %v970 = vld [vmem:[%s8 + $0xb50] sm:$0xff]
    %v971 = vld [vmem:[%s8 + $0xb58] sm:$0xff]
    %v972 = vld [vmem:[%s8 + $0xb60] sm:$0xff]
    %v973 = vld [vmem:[%s8 + $0xb68] sm:$0xff]
    %v974 = vld [vmem:[%s8 + $0xb70] sm:$0xff]
    %v975 = vld [vmem:[%s8 + $0xb78] sm:$0xff]
    %v976 = vld [vmem:[%s8 + $0xb80] sm:$0xff]
    %v977 = vld [vmem:[%s8 + $0xb88] sm:$0xff]
    %v978 = vld [vmem:[%s8 + $0xb90] sm:$0xff]
    %v979 = vld [vmem:[%s8 + $0xb98] sm:$0xff]
    %v980 = vld [vmem:[%s8 + $0xba0] sm:$0xff]
    %v981 = vld [vmem:[%s8 + $0xba8] sm:$0xff]
    %v982 = vld [vmem:[%s8 + $0xbb0] sm:$0xff]
    %v983 = vld [vmem:[%s8 + $0xbb8] sm:$0xff]
    %v984 = vld [vmem:[%s8 + $0xbc0] sm:$0xff]
    %v985 = vld [vmem:[%s8 + $0xbc8] sm:$0xff]
    %v986 = vld [vmem:[%s8 + $0xbd0] sm:$0xff]
    %v987 = vld [vmem:[%s8 + $0xbd8] sm:$0xff]
    %v988 = vld [vmem:[%s8 + $0xbe0] sm:$0xff]
    %v989 = vld [vmem:[%s8 + $0xbe8] sm:$0xff]
    %v990 = vld [vmem:[%s8 + $0xbf0] sm:$0xff]
    %v991 = vld [vmem:[%s8 + $0xbf8] sm:$0xff]
    %v992 = vld [vmem:[%s8 + $0xc00] sm:$0xff]
    %v993 = vld [vmem:[%s8 + $0xc08] sm:$0xff]
    %v994 = vld [vmem:[%s8 + $0xc10] sm:$0xff]
    %v995 = vld [vmem:[%s8 + $0xc18] sm:$0xff]
    %v996 = vld [vmem:[%s8 + $0xc20] sm:$0xff]
    %v997 = vld [vmem:[%s8 + $0xc28] sm:$0xff]
    %v998 = vld [vmem:[%s8 + $0xc30] sm:$0xff]
    %v999 = vld [vmem:[%s8 + $0xc38] sm:$0xff]
    %v1000 = vld [vmem:[%s8 + $0xc40] sm:$0xff]
    %v1001 = vld [vmem:[%s8 + $0xc48] sm:$0xff]
    %v1002 = vld [vmem:[%s8 + $0xc50] sm:$0xff]
    %v1003 = vld [vmem:[%s8 + $0xc58] sm:$0xff]
    %v1004 = vld [vmem:[%s8 + $0xc60] sm:$0xff]
    %v1005 = vld [vmem:[%s8 + $0xc68] sm:$0xff]
    %v1006 = vld [vmem:[%s8 + $0xc70] sm:$0xff]
    %v1007 = vld [vmem:[%s8 + $0xc78] sm:$0xff]
    %v1008 = vld [vmem:[%s8 + $0xc80] sm:$0xff]
    %v1009 = vld [vmem:[%s8 + $0xc88] sm:$0xff]
    %v1010 = vld [vmem:[%s8 + $0xc90] sm:$0xff]
    %v1011 = vld [vmem:[%s8 + $0xc98] sm:$0xff]
    %v1012 = vld [vmem:[%s8 + $0xca0] sm:$0xff]
    %v1013 = vld [vmem:[%s8 + $0xca8] sm:$0xff]
    %v1014 = vld [vmem:[%s8 + $0xcb0] sm:$0xff]
    %v1015 = vld [vmem:[%s8 + $0xcb8] sm:$0xff]
    %v1016 = vld [vmem:[%s8 + $0xcc0] sm:$0xff]
    %v1017 = vld [vmem:[%s8 + $0xcc8] sm:$0xff]
    %v1018 = vld [vmem:[%s8 + $0xcd0] sm:$0xff]
    %v1019 = vld [vmem:[%s8 + $0xcd8] sm:$0xff]
    %v1020 = vld [vmem:[%s8 + $0xce0] sm:$0xff]
    %v1021 = vld [vmem:[%s8 + $0xce8] sm:$0xff]
    %v1022 = vld [vmem:[%s8 + $0xcf0] sm:$0xff]
    %v1023 = vld [vmem:[%s8 + $0xcf8] sm:$0xff]
    %v1024 = vld [vmem:[%s8 + $0xd00] sm:$0xff]
    %v1025 = vld [vmem:[%s8 + $0xd08] sm:$0xff]
    %v1026 = vld [vmem:[%s8 + $0xd10] sm:$0xff]
    %v1027 = vld [vmem:[%s8 + $0xd18] sm:$0xff]
    %v1028 = vld [vmem:[%s8 + $0xd20] sm:$0xff]
    %v1029 = vld [vmem:[%s8 + $0xd28] sm:$0xff]
    %v1030 = vld [vmem:[%s8 + $0xd30] sm:$0xff]
    %v1031 = vld [vmem:[%s8 + $0xd38] sm:$0xff]
    %v1032 = vld [vmem:[%s8 + $0xd40] sm:$0xff]
    %v1033 = vld [vmem:[%s8 + $0xd48] sm:$0xff]
    %v1034 = vld [vmem:[%s8 + $0xd50] sm:$0xff]
    %v1035 = vld [vmem:[%s8 + $0xd58] sm:$0xff]
    %v1036 = vld [vmem:[%s8 + $0xd60] sm:$0xff]
    %v1037 = vld [vmem:[%s8 + $0xd68] sm:$0xff]
    %v1038 = vld [vmem:[%s8 + $0xd70] sm:$0xff]
    %v1039 = vld [vmem:[%s8 + $0xd78] sm:$0xff]
    %v1040 = vld [vmem:[%s8 + $0xd80] sm:$0xff]
    %v1041 = vld [vmem:[%s8 + $0xd88] sm:$0xff]
    %v1042 = vld [vmem:[%s8 + $0xd90] sm:$0xff]
    %v1043 = vld [vmem:[%s8 + $0xd98] sm:$0xff]
    %v1044 = vld [vmem:[%s8 + $0xda0] sm:$0xff]
    %v1045 = vld [vmem:[%s8 + $0xda8] sm:$0xff]
    %v1046 = vld [vmem:[%s8 + $0xdb0] sm:$0xff]
    %v1047 = vld [vmem:[%s8 + $0xdb8] sm:$0xff]
    %v1048 = vld [vmem:[%s8 + $0xdc0] sm:$0xff]
    %v1049 = vld [vmem:[%s8 + $0xdc8] sm:$0xff]
    %v1050 = vld [vmem:[%s8 + $0xdd0] sm:$0xff]
    %v1051 = vld [vmem:[%s8 + $0xdd8] sm:$0xff]
    %v1052 = vld [vmem:[%s8 + $0xde0] sm:$0xff]
    %v1053 = vld [vmem:[%s8 + $0xde8] sm:$0xff]
    %v1054 = vld [vmem:[%s8 + $0xdf0] sm:$0xff]
    %v1055 = vld [vmem:[%s8 + $0xdf8] sm:$0xff]
    %v1056 = vld [vmem:[%s8 + $0xe00] sm:$0xff]
    %v1057 = vld [vmem:[%s8 + $0xe08] sm:$0xff]
    %v1058 = vld [vmem:[%s8 + $0xe10] sm:$0xff]
    %v1059 = vld [vmem:[%s8 + $0xe18] sm:$0xff]
    %v1060 = vld [vmem:[%s8 + $0xe20] sm:$0xff]
    %v1061 = vld [vmem:[%s8 + $0xe28] sm:$0xff]
    %v1062 = vld [vmem:[%s8 + $0xe30] sm:$0xff]
    %v1063 = vld [vmem:[%s8 + $0xe38] sm:$0xff]
    %v1064 = vld [vmem:[%s8 + $0xe40] sm:$0xff]
    %v1065 = vld [vmem:[%s8 + $0xe48] sm:$0xff]
    %v1066 = vld [vmem:[%s8 + $0xe50] sm:$0xff]
    %v1067 = vld [vmem:[%s8 + $0xe58] sm:$0xff]
    %v1068 = vld [vmem:[%s8 + $0xe60] sm:$0xff]
    %v1069 = vld [vmem:[%s8 + $0xe68] sm:$0xff]
    %v1070 = vld [vmem:[%s8 + $0xe70] sm:$0xff]
    %v1071 = vld [vmem:[%s8 + $0xe78] sm:$0xff]
    %v1072 = vld [vmem:[%s8 + $0xe80] sm:$0xff]
    %v1073 = vld [vmem:[%s8 + $0xe88] sm:$0xff]
    %v1074 = vld [vmem:[%s8 + $0xe90] sm:$0xff]
    %v1075 = vld [vmem:[%s8 + $0xe98] sm:$0xff]
    %v1076 = vld [vmem:[%s8 + $0xea0] sm:$0xff]
    %v1077 = vld [vmem:[%s8 + $0xea8] sm:$0xff]
    %v1078 = vld [vmem:[%s8 + $0xeb0] sm:$0xff]
    %v1079 = vld [vmem:[%s8 + $0xeb8] sm:$0xff]
    %v1080 = vld [vmem:[%s8 + $0xec0] sm:$0xff]
    %v1081 = vld [vmem:[%s8 + $0xec8] sm:$0xff]
    %v1082 = vld [vmem:[%s8 + $0xed0] sm:$0xff]
    %v1083 = vld [vmem:[%s8 + $0xed8] sm:$0xff]
    %v1084 = vld [vmem:[%s8 + $0xee0] sm:$0xff]
    %v1085 = vld [vmem:[%s8 + $0xee8] sm:$0xff]
    %v1086 = vld [vmem:[%s8 + $0xef0] sm:$0xff]
    %v1087 = vld [vmem:[%s8 + $0xef8] sm:$0xff]
    %v1088 = vld [vmem:[%s8 + $0xf00] sm:$0xff]
    %v1089 = vld [vmem:[%s8 + $0xf08] sm:$0xff]
    %v1090 = vld [vmem:[%s8 + $0xf10] sm:$0xff]
    %v1091 = vld [vmem:[%s8 + $0xf18] sm:$0xff]
    %v1092 = vld [vmem:[%s8 + $0xf20] sm:$0xff]
    %v1093 = vld [vmem:[%s8 + $0xf28] sm:$0xff]
    %v1094 = vld [vmem:[%s8 + $0xf30] sm:$0xff]
    %v1095 = vld [vmem:[%s8 + $0xf38] sm:$0xff]
    %v1096 = vld [vmem:[%s8 + $0xf40] sm:$0xff]
    %v1097 = vld [vmem:[%s8 + $0xf48] sm:$0xff]
    %v1098 = vld [vmem:[%s8 + $0xf50] sm:$0xff]
    %v1099 = vld [vmem:[%s8 + $0xf58] sm:$0xff]
    %v1100 = vld [vmem:[%s8 + $0xf60] sm:$0xff]
    %v1101 = vld [vmem:[%s8 + $0xf68] sm:$0xff]
    %v1102 = vld [vmem:[%s8 + $0xf70] sm:$0xff]
    %v1103 = vld [vmem:[%s8 + $0xf78] sm:$0xff]
    %v1104 = vld [vmem:[%s8 + $0xf80] sm:$0xff]
    %v1105 = vld [vmem:[%s8 + $0xf88] sm:$0xff]
    %v1106 = vld [vmem:[%s8 + $0xf90] sm:$0xff]
    %v1107 = vld [vmem:[%s8 + $0xf98] sm:$0xff]
    %v1108 = vld [vmem:[%s8 + $0xfa0] sm:$0xff]
    %v1109 = vld [vmem:[%s8 + $0xfa8] sm:$0xff]
    %v1110 = vld [vmem:[%s8 + $0xfb0] sm:$0xff]
    %v1111 = vld [vmem:[%s8 + $0xfb8] sm:$0xff]
    %v1112 = vld [vmem:[%s8 + $0xfc0] sm:$0xff]
    %v1113 = vld [vmem:[%s8 + $0xfc8] sm:$0xff]
    %v1114 = vld [vmem:[%s8 + $0xfd0] sm:$0xff]
    %v1115 = vld [vmem:[%s8 + $0xfd8] sm:$0xff]
    %v1116 = vld [vmem:[%s8 + $0xfe0] sm:$0xff]
    %v1117 = vld [vmem:[%s8 + $0xfe8] sm:$0xff]
    %v1118 = vld [vmem:[%s8 + $0xff0] sm:$0xff]
    %v1119 = vld [vmem:[%s8 + $0xff8] sm:$0xff]
    %v1120 = vld [vmem:[%s8 + $0x1000] sm:$0xff]
    %v1121 = vld [vmem:[%s8 + $0x1008] sm:$0xff]
    %v1122 = vld [vmem:[%s8 + $0x1010] sm:$0xff]
    %v1123 = vld [vmem:[%s8 + $0x1018] sm:$0xff]
    %v1124 = vld [vmem:[%s8 + $0x1020] sm:$0xff]
    %v1125 = vld [vmem:[%s8 + $0x1028] sm:$0xff]
    %v1126 = vld [vmem:[%s8 + $0x1030] sm:$0xff]
    %v1127 = vld [vmem:[%s8 + $0x1038] sm:$0xff]
    %v1128 = vld [vmem:[%s8 + $0x1040] sm:$0xff]
    %v1129 = vld [vmem:[%s8 + $0x1048] sm:$0xff]
    %v1130 = vld [vmem:[%s8 + $0x1050] sm:$0xff]
    %v1131 = vld [vmem:[%s8 + $0x1058] sm:$0xff]
    %v1132 = vld [vmem:[%s8 + $0x1060] sm:$0xff]
    %v1133 = vld [vmem:[%s8 + $0x1068] sm:$0xff]
    %v1134 = vld [vmem:[%s8 + $0x1070] sm:$0xff]
    %v1135 = vld [vmem:[%s8 + $0x1078] sm:$0xff]
    %v1136 = vld [vmem:[%s9] sm:$0xff]
    %v1137 = vld [vmem:[%s9 + $0x8] sm:$0xff]
    %v1138 = vld [vmem:[%s9 + $0x10] sm:$0xff]
    %v1139 = vld [vmem:[%s9 + $0x18] sm:$0xff]
    %v1140 = vld [vmem:[%s9 + $0x20] sm:$0xff]
    %v1141 = vld [vmem:[%s9 + $0x28] sm:$0xff]
    %v1142 = vld [vmem:[%s9 + $0x30] sm:$0xff]
    %v1143 = vld [vmem:[%s9 + $0x38] sm:$0xff]
    %v1144 = vld [vmem:[%s9 + $0x40] sm:$0xff]
    %v1145 = vld [vmem:[%s9 + $0x48] sm:$0xff]
    %v1146 = vld [vmem:[%s9 + $0x50] sm:$0xff]
    %v1147 = vld [vmem:[%s9 + $0x58] sm:$0xff]
    %v1148 = vld [vmem:[%s9 + $0x60] sm:$0xff]
    %v1149 = vld [vmem:[%s9 + $0x68] sm:$0xff]
    %v1150 = vld [vmem:[%s9 + $0x70] sm:$0xff]
    %v1151 = vld [vmem:[%s9 + $0x78] sm:$0xff]
    %v1152 = vld [vmem:[%s9 + $0x80] sm:$0xff]
    %v1153 = vld [vmem:[%s9 + $0x88] sm:$0xff]
    %v1154 = vld [vmem:[%s9 + $0x90] sm:$0xff]
    %v1155 = vld [vmem:[%s9 + $0x98] sm:$0xff]
    %v1156 = vld [vmem:[%s9 + $0xa0] sm:$0xff]
    %v1157 = vld [vmem:[%s9 + $0xa8] sm:$0xff]
    %v1158 = vld [vmem:[%s9 + $0xb0] sm:$0xff]
    %v1159 = vld [vmem:[%s9 + $0xb8] sm:$0xff]
    %v1160 = vld [vmem:[%s9 + $0xc0] sm:$0xff]
    %v1161 = vld [vmem:[%s9 + $0xc8] sm:$0xff]
    %v1162 = vld [vmem:[%s9 + $0xd0] sm:$0xff]
    %v1163 = vld [vmem:[%s9 + $0xd8] sm:$0xff]
    %v1164 = vld [vmem:[%s9 + $0xe0] sm:$0xff]
    %v1165 = vld [vmem:[%s9 + $0xe8] sm:$0xff]
    %v1166 = vld [vmem:[%s9 + $0xf0] sm:$0xff]
    %v1167 = vld [vmem:[%s9 + $0xf8] sm:$0xff]
    %v1168 = vld [vmem:[%s9 + $0x100] sm:$0xff]
    %v1169 = vld [vmem:[%s9 + $0x108] sm:$0xff]
    %v1170 = vld [vmem:[%s9 + $0x110] sm:$0xff]
    %v1171 = vld [vmem:[%s9 + $0x118] sm:$0xff]
    %v1172 = vld [vmem:[%s9 + $0x120] sm:$0xff]
    %v1173 = vld [vmem:[%s9 + $0x128] sm:$0xff]
    %v1174 = vld [vmem:[%s9 + $0x130] sm:$0xff]
    %v1175 = vld [vmem:[%s9 + $0x138] sm:$0xff]
    %v1176 = vld [vmem:[%s9 + $0x140] sm:$0xff]
    %v1177 = vld [vmem:[%s9 + $0x148] sm:$0xff]
    %v1178 = vld [vmem:[%s9 + $0x150] sm:$0xff]
    %v1179 = vld [vmem:[%s9 + $0x158] sm:$0xff]
    %v1180 = vld [vmem:[%s9 + $0x160] sm:$0xff]
    %v1181 = vld [vmem:[%s9 + $0x168] sm:$0xff]
    %v1182 = vld [vmem:[%s9 + $0x170] sm:$0xff]
    %v1183 = vld [vmem:[%s9 + $0x178] sm:$0xff]
    %v1184 = vld [vmem:[%s9 + $0x180] sm:$0xff]
    %v1185 = vld [vmem:[%s9 + $0x188] sm:$0xff]
    %v1186 = vld [vmem:[%s9 + $0x190] sm:$0xff]
    %v1187 = vld [vmem:[%s9 + $0x198] sm:$0xff]
    %v1188 = vld [vmem:[%s9 + $0x1a0] sm:$0xff]
    %v1189 = vld [vmem:[%s9 + $0x1a8] sm:$0xff]
    %v1190 = vld [vmem:[%s9 + $0x1b0] sm:$0xff]
    %v1191 = vld [vmem:[%s9 + $0x1b8] sm:$0x7]
    %v1192 = vld [vmem:[%s9 + $0x1c0] sm:$0x7]
    %v1193 = vld [vmem:[%s9 + $0x1c8] sm:$0x7]
    %v1194 = vld [vmem:[%s9 + $0x1d0] sm:$0x7]
    %v1195 = vld [vmem:[%s9 + $0x1d8] sm:$0x7]
    %v1196 = vld [vmem:[%s9 + $0x1e0] sm:$0x7]
    %v1197 = vld [vmem:[%s9 + $0x1e8] sm:$0x7]
    %v1198 = vld [vmem:[%s9 + $0x1f0] sm:$0x7]
    %v1199 = vld [vmem:[%s9 + $0x1f8] sm:$0x7]
    %v1200 = vld [vmem:[%s9 + $0x200] sm:$0x7]
    %v1201 = vld [vmem:[%s9 + $0x208] sm:$0x7]
    %vm1202 = vcmask 351232
    %v1204 = vsel %vm1202, %v39, 0
    %vm1206 = vcmask 1042432
    %v1208 = vsel %vm1206, %v1191, 0
    %v1211 = vsel %vm1206, %v1192, 0
    %v1214 = vsel %vm1206, %v1193, 0
    %v1217 = vsel %vm1206, %v1194, 0
    %v1220 = vsel %vm1206, %v1195, 0
    %v1223 = vsel %vm1206, %v1196, 0
    %v1226 = vsel %vm1206, %v1197, 0
    %v1229 = vsel %vm1206, %v1198, 0
    %v1232 = vsel %vm1206, %v1199, 0
    %v1235 = vsel %vm1206, %v1200, 0
    %v1238 = vsel %vm1206, %v1201, 0
    %1240 = vmatpush.msra.mxu0 0.0
    %1241 = vmatpush.msra.mxu0 0.0
    %1242 = vmatpush.msra.mxu0 0.0
    %1243 = vmatpush.msra.mxu0 0.0
    %1244 = vmatpush.msra.mxu0 0.0
    %1245 = vmatpush.msra.mxu0 0.0
    %1246 = vmatpush.msra.mxu0 0.0
    %1247 = vmatpush.msra.mxu0 0.0
    %1248 = vmatpush.msra.mxu0 0.0
    %1249 = vmatpush.msra.mxu0 0.0
    %1250 = vmatpush.msra.mxu0 %v1208
    %1251 = vmatpush.msra.mxu0 %v1180
    %1252 = vmatpush.msra.mxu0 %v1169
    %1253 = vmatpush.msra.mxu0 %v1158
    %1254 = vmatpush.msra.mxu0 %v1147
    %1255 = vmatpush.msra.mxu0 %v1136
    %1256 = vmatmul.f32.gmra.mxu0 %v1204
    %v1257 = vpop.f32.mrf.mxu0
    %v1258 = vadd.f32 0.0, %v1257
    %1259 = vdwg.mxu0
    %1260 = vmatpush.msra.mxu0 0.0
    %1261 = vmatpush.msra.mxu0 0.0
    %1262 = vmatpush.msra.mxu0 0.0
    %1263 = vmatpush.msra.mxu0 0.0
    %1264 = vmatpush.msra.mxu0 0.0
    %1265 = vmatpush.msra.mxu0 0.0
    %1266 = vmatpush.msra.mxu0 0.0
    %1267 = vmatpush.msra.mxu0 0.0
    %1268 = vmatpush.msra.mxu0 0.0
    %1269 = vmatpush.msra.mxu0 0.0
    %1270 = vmatpush.msra.mxu0 %v1211
    %1271 = vmatpush.msra.mxu0 %v1181
    %1272 = vmatpush.msra.mxu0 %v1170
    %1273 = vmatpush.msra.mxu0 %v1159
    %1274 = vmatpush.msra.mxu0 %v1148
    %1275 = vmatpush.msra.mxu0 %v1137
    %1276 = vmatmul.f32.gmra.mxu0 %v1204
    %v1277 = vpop.f32.mrf.mxu0
    %v1278 = vadd.f32 0.0, %v1277
    %1279 = vdwg.mxu0
    %1280 = vmatpush.msra.mxu0 0.0
    %1281 = vmatpush.msra.mxu0 0.0
    %1282 = vmatpush.msra.mxu0 0.0
    %1283 = vmatpush.msra.mxu0 0.0
    %1284 = vmatpush.msra.mxu0 0.0
    %1285 = vmatpush.msra.mxu0 0.0
    %1286 = vmatpush.msra.mxu0 0.0
    %1287 = vmatpush.msra.mxu0 0.0
    %1288 = vmatpush.msra.mxu0 0.0
    %1289 = vmatpush.msra.mxu0 0.0
    %1290 = vmatpush.msra.mxu0 %v1214
    %1291 = vmatpush.msra.mxu0 %v1182
    %1292 = vmatpush.msra.mxu0 %v1171
    %1293 = vmatpush.msra.mxu0 %v1160
    %1294 = vmatpush.msra.mxu0 %v1149
    %1295 = vmatpush.msra.mxu0 %v1138
    %1296 = vmatmul.f32.gmra.mxu0 %v1204
    %v1297 = vpop.f32.mrf.mxu0
    %v1298 = vadd.f32 0.0, %v1297
    %1299 = vdwg.mxu0
    %1300 = vmatpush.msra.mxu0 0.0
    %1301 = vmatpush.msra.mxu0 0.0
    %1302 = vmatpush.msra.mxu0 0.0
    %1303 = vmatpush.msra.mxu0 0.0
    %1304 = vmatpush.msra.mxu0 0.0
    %1305 = vmatpush.msra.mxu0 0.0
    %1306 = vmatpush.msra.mxu0 0.0
    %1307 = vmatpush.msra.mxu0 0.0
    %1308 = vmatpush.msra.mxu0 0.0
    %1309 = vmatpush.msra.mxu0 0.0
    %1310 = vmatpush.msra.mxu0 %v1217
    %1311 = vmatpush.msra.mxu0 %v1183
    %1312 = vmatpush.msra.mxu0 %v1172
    %1313 = vmatpush.msra.mxu0 %v1161
    %1314 = vmatpush.msra.mxu0 %v1150
    %1315 = vmatpush.msra.mxu0 %v1139
    %1316 = vmatmul.f32.gmra.mxu0 %v1204
    %v1317 = vpop.f32.mrf.mxu0
    %v1318 = vadd.f32 0.0, %v1317
    %1319 = vdwg.mxu0
    %1320 = vmatpush.msra.mxu0 0.0
    %1321 = vmatpush.msra.mxu0 0.0
    %1322 = vmatpush.msra.mxu0 0.0
    %1323 = vmatpush.msra.mxu0 0.0
    %1324 = vmatpush.msra.mxu0 0.0
    %1325 = vmatpush.msra.mxu0 0.0
    %1326 = vmatpush.msra.mxu0 0.0
    %1327 = vmatpush.msra.mxu0 0.0
    %1328 = vmatpush.msra.mxu0 0.0
    %1329 = vmatpush.msra.mxu0 0.0
    %1330 = vmatpush.msra.mxu0 %v1220
    %1331 = vmatpush.msra.mxu0 %v1184
    %1332 = vmatpush.msra.mxu0 %v1173
    %1333 = vmatpush.msra.mxu0 %v1162
    %1334 = vmatpush.msra.mxu0 %v1151
    %1335 = vmatpush.msra.mxu0 %v1140
    %1336 = vmatmul.f32.gmra.mxu0 %v1204
    %v1337 = vpop.f32.mrf.mxu0
    %v1338 = vadd.f32 0.0, %v1337
    %1339 = vdwg.mxu0
    %1340 = vmatpush.msra.mxu0 0.0
    %1341 = vmatpush.msra.mxu0 0.0
    %1342 = vmatpush.msra.mxu0 0.0
    %1343 = vmatpush.msra.mxu0 0.0
    %1344 = vmatpush.msra.mxu0 0.0
    %1345 = vmatpush.msra.mxu0 0.0
    %1346 = vmatpush.msra.mxu0 0.0
    %1347 = vmatpush.msra.mxu0 0.0
    %1348 = vmatpush.msra.mxu0 0.0
    %1349 = vmatpush.msra.mxu0 0.0
    %1350 = vmatpush.msra.mxu0 %v1223
    %1351 = vmatpush.msra.mxu0 %v1185
    %1352 = vmatpush.msra.mxu0 %v1174
    %1353 = vmatpush.msra.mxu0 %v1163
    %1354 = vmatpush.msra.mxu0 %v1152
    %1355 = vmatpush.msra.mxu0 %v1141
    %1356 = vmatmul.f32.gmra.mxu0 %v1204
    %v1357 = vpop.f32.mrf.mxu0
    %v1358 = vadd.f32 0.0, %v1357
    %1359 = vdwg.mxu0
    %1360 = vmatpush.msra.mxu0 0.0
    %1361 = vmatpush.msra.mxu0 0.0
    %1362 = vmatpush.msra.mxu0 0.0
    %1363 = vmatpush.msra.mxu0 0.0
    %1364 = vmatpush.msra.mxu0 0.0
    %1365 = vmatpush.msra.mxu0 0.0
    %1366 = vmatpush.msra.mxu0 0.0
    %1367 = vmatpush.msra.mxu0 0.0
    %1368 = vmatpush.msra.mxu0 0.0
    %1369 = vmatpush.msra.mxu0 0.0
    %1370 = vmatpush.msra.mxu0 %v1226
    %1371 = vmatpush.msra.mxu0 %v1186
    %1372 = vmatpush.msra.mxu0 %v1175
    %1373 = vmatpush.msra.mxu0 %v1164
    %1374 = vmatpush.msra.mxu0 %v1153
    %1375 = vmatpush.msra.mxu0 %v1142
    %1376 = vmatmul.f32.gmra.mxu0 %v1204
    %v1377 = vpop.f32.mrf.mxu0
    %v1378 = vadd.f32 0.0, %v1377
    %1379 = vdwg.mxu0
    %1380 = vmatpush.msra.mxu0 0.0
    %1381 = vmatpush.msra.mxu0 0.0
    %1382 = vmatpush.msra.mxu0 0.0
    %1383 = vmatpush.msra.mxu0 0.0
    %1384 = vmatpush.msra.mxu0 0.0
    %1385 = vmatpush.msra.mxu0 0.0
    %1386 = vmatpush.msra.mxu0 0.0
    %1387 = vmatpush.msra.mxu0 0.0
    %1388 = vmatpush.msra.mxu0 0.0
    %1389 = vmatpush.msra.mxu0 0.0
    %1390 = vmatpush.msra.mxu0 %v1229
    %1391 = vmatpush.msra.mxu0 %v1187
    %1392 = vmatpush.msra.mxu0 %v1176
    %1393 = vmatpush.msra.mxu0 %v1165
    %1394 = vmatpush.msra.mxu0 %v1154
    %1395 = vmatpush.msra.mxu0 %v1143
    %1396 = vmatmul.f32.gmra.mxu0 %v1204
    %v1397 = vpop.f32.mrf.mxu0
    %v1398 = vadd.f32 0.0, %v1397
    %1399 = vdwg.mxu0
    %1400 = vmatpush.msra.mxu0 0.0
    %1401 = vmatpush.msra.mxu0 0.0
    %1402 = vmatpush.msra.mxu0 0.0
    %1403 = vmatpush.msra.mxu0 0.0
    %1404 = vmatpush.msra.mxu0 0.0
    %1405 = vmatpush.msra.mxu0 0.0
    %1406 = vmatpush.msra.mxu0 0.0
    %1407 = vmatpush.msra.mxu0 0.0
    %1408 = vmatpush.msra.mxu0 0.0
    %1409 = vmatpush.msra.mxu0 0.0
    %1410 = vmatpush.msra.mxu0 %v1232
    %1411 = vmatpush.msra.mxu0 %v1188
    %1412 = vmatpush.msra.mxu0 %v1177
    %1413 = vmatpush.msra.mxu0 %v1166
    %1414 = vmatpush.msra.mxu0 %v1155
    %1415 = vmatpush.msra.mxu0 %v1144
    %1416 = vmatmul.f32.gmra.mxu0 %v1204
    %v1417 = vpop.f32.mrf.mxu0
    %v1418 = vadd.f32 0.0, %v1417
    %1419 = vdwg.mxu0
    %1420 = vmatpush.msra.mxu0 0.0
    %1421 = vmatpush.msra.mxu0 0.0
    %1422 = vmatpush.msra.mxu0 0.0
    %1423 = vmatpush.msra.mxu0 0.0
    %1424 = vmatpush.msra.mxu0 0.0
    %1425 = vmatpush.msra.mxu0 0.0
    %1426 = vmatpush.msra.mxu0 0.0
    %1427 = vmatpush.msra.mxu0 0.0
    %1428 = vmatpush.msra.mxu0 0.0
    %1429 = vmatpush.msra.mxu0 0.0
    %1430 = vmatpush.msra.mxu0 %v1235
    %1431 = vmatpush.msra.mxu0 %v1189
    %1432 = vmatpush.msra.mxu0 %v1178
    %1433 = vmatpush.msra.mxu0 %v1167
    %1434 = vmatpush.msra.mxu0 %v1156
    %1435 = vmatpush.msra.mxu0 %v1145
    %1436 = vmatmul.f32.gmra.mxu0 %v1204
    %v1437 = vpop.f32.mrf.mxu0
    %v1438 = vadd.f32 0.0, %v1437
    %1439 = vdwg.mxu0
    %1440 = vmatpush.msra.mxu0 0.0
    %1441 = vmatpush.msra.mxu0 0.0
    %1442 = vmatpush.msra.mxu0 0.0
    %1443 = vmatpush.msra.mxu0 0.0
    %1444 = vmatpush.msra.mxu0 0.0
    %1445 = vmatpush.msra.mxu0 0.0
    %1446 = vmatpush.msra.mxu0 0.0
    %1447 = vmatpush.msra.mxu0 0.0
    %1448 = vmatpush.msra.mxu0 0.0
    %1449 = vmatpush.msra.mxu0 0.0
    %1450 = vmatpush.msra.mxu0 %v1238
    %1451 = vmatpush.msra.mxu0 %v1190
    %1452 = vmatpush.msra.mxu0 %v1179
    %1453 = vmatpush.msra.mxu0 %v1168
    %1454 = vmatpush.msra.mxu0 %v1157
    %1455 = vmatpush.msra.mxu0 %v1146
    %1456 = vmatmul.f32.gmra.mxu0 %v1204
    %v1457 = vpop.f32.mrf.mxu0
    %v1458 = vadd.f32 0.0, %v1457
    %1459 = vdwg.mxu0
    %1460 = vmatpush.msra.mxu0 %v773
    %1461 = vmatpush.msra.mxu0 %v762
    %1462 = vmatpush.msra.mxu0 %v751
    %1463 = vmatpush.msra.mxu0 %v740
    %1464 = vmatpush.msra.mxu0 %v729
    %1465 = vmatpush.msra.mxu0 %v718
    %1466 = vmatpush.msra.mxu0 %v707
    %1467 = vmatpush.msra.mxu0 %v696
    %1468 = vmatpush.msra.mxu0 %v685
    %1469 = vmatpush.msra.mxu0 %v674
    %1470 = vmatpush.msra.mxu0 %v663
    %1471 = vmatpush.msra.mxu0 %v652
    %1472 = vmatpush.msra.mxu0 %v641
    %1473 = vmatpush.msra.mxu0 %v630
    %1474 = vmatpush.msra.mxu0 %v619
    %1475 = vmatpush.msra.mxu0 %v608
    %1476 = vmatmul.f32.gmra.mxu0 %v605
    %v1477 = vpop.f32.mrf.mxu0
    %v1478 = vadd.f32 %v295, %v1477
    %1479 = vdwg.mxu0
    %1480 = vmatpush.msra.mxu0 %v949
    %1481 = vmatpush.msra.mxu0 %v938
    %1482 = vmatpush.msra.mxu0 %v927
    %1483 = vmatpush.msra.mxu0 %v916
    %1484 = vmatpush.msra.mxu0 %v905
    %1485 = vmatpush.msra.mxu0 %v894
    %1486 = vmatpush.msra.mxu0 %v883
    %1487 = vmatpush.msra.mxu0 %v872
    %1488 = vmatpush.msra.mxu0 %v861
    %1489 = vmatpush.msra.mxu0 %v850
    %1490 = vmatpush.msra.mxu0 %v839
    %1491 = vmatpush.msra.mxu0 %v828
    %1492 = vmatpush.msra.mxu0 %v817
    %1493 = vmatpush.msra.mxu0 %v806
    %1494 = vmatpush.msra.mxu0 %v795
    %1495 = vmatpush.msra.mxu0 %v784
    %1496 = vmatmul.f32.gmra.mxu0 %v606
    %v1497 = vpop.f32.mrf.mxu0
    %v1498 = vadd.f32 %v1478, %v1497
    %1499 = vdwg.mxu0
    %1500 = vmatpush.msra.mxu0 %v1125
    %1501 = vmatpush.msra.mxu0 %v1114
    %1502 = vmatpush.msra.mxu0 %v1103
    %1503 = vmatpush.msra.mxu0 %v1092
    %1504 = vmatpush.msra.mxu0 %v1081
    %1505 = vmatpush.msra.mxu0 %v1070
    %1506 = vmatpush.msra.mxu0 %v1059
    %1507 = vmatpush.msra.mxu0 %v1048
    %1508 = vmatpush.msra.mxu0 %v1037
    %1509 = vmatpush.msra.mxu0 %v1026
    %1510 = vmatpush.msra.mxu0 %v1015
    %1511 = vmatpush.msra.mxu0 %v1004
    %1512 = vmatpush.msra.mxu0 %v993
    %1513 = vmatpush.msra.mxu0 %v982
    %1514 = vmatpush.msra.mxu0 %v971
    %1515 = vmatpush.msra.mxu0 %v960
    %1516 = vmatmul.f32.gmra.mxu0 %v607
    %v1517 = vpop.f32.mrf.mxu0
    %v1518 = vadd.f32 %v1498, %v1517
    %1519 = vdwg.mxu0
    %1520 = vmatpush.msra.mxu0 %v774
    %1521 = vmatpush.msra.mxu0 %v763
    %1522 = vmatpush.msra.mxu0 %v752
    %1523 = vmatpush.msra.mxu0 %v741
    %1524 = vmatpush.msra.mxu0 %v730
    %1525 = vmatpush.msra.mxu0 %v719
    %1526 = vmatpush.msra.mxu0 %v708
    %1527 = vmatpush.msra.mxu0 %v697
    %1528 = vmatpush.msra.mxu0 %v686
    %1529 = vmatpush.msra.mxu0 %v675
    %1530 = vmatpush.msra.mxu0 %v664
    %1531 = vmatpush.msra.mxu0 %v653
    %1532 = vmatpush.msra.mxu0 %v642
    %1533 = vmatpush.msra.mxu0 %v631
    %1534 = vmatpush.msra.mxu0 %v620
    %1535 = vmatpush.msra.mxu0 %v609
    %1536 = vmatmul.f32.gmra.mxu0 %v605
    %v1537 = vpop.f32.mrf.mxu0
    %v1538 = vadd.f32 %v315, %v1537
    %1539 = vdwg.mxu0
    %1540 = vmatpush.msra.mxu0 %v950
    %1541 = vmatpush.msra.mxu0 %v939
    %1542 = vmatpush.msra.mxu0 %v928
    %1543 = vmatpush.msra.mxu0 %v917
    %1544 = vmatpush.msra.mxu0 %v906
    %1545 = vmatpush.msra.mxu0 %v895
    %1546 = vmatpush.msra.mxu0 %v884
    %1547 = vmatpush.msra.mxu0 %v873
    %1548 = vmatpush.msra.mxu0 %v862
    %1549 = vmatpush.msra.mxu0 %v851
    %1550 = vmatpush.msra.mxu0 %v840
    %1551 = vmatpush.msra.mxu0 %v829
    %1552 = vmatpush.msra.mxu0 %v818
    %1553 = vmatpush.msra.mxu0 %v807
    %1554 = vmatpush.msra.mxu0 %v796
    %1555 = vmatpush.msra.mxu0 %v785
    %1556 = vmatmul.f32.gmra.mxu0 %v606
    %v1557 = vpop.f32.mrf.mxu0
    %v1558 = vadd.f32 %v1538, %v1557
    %1559 = vdwg.mxu0
    %1560 = vmatpush.msra.mxu0 %v1126
    %1561 = vmatpush.msra.mxu0 %v1115
    %1562 = vmatpush.msra.mxu0 %v1104
    %1563 = vmatpush.msra.mxu0 %v1093
    %1564 = vmatpush.msra.mxu0 %v1082
    %1565 = vmatpush.msra.mxu0 %v1071
    %1566 = vmatpush.msra.mxu0 %v1060
    %1567 = vmatpush.msra.mxu0 %v1049
    %1568 = vmatpush.msra.mxu0 %v1038
    %1569 = vmatpush.msra.mxu0 %v1027
    %1570 = vmatpush.msra.mxu0 %v1016
    %1571 = vmatpush.msra.mxu0 %v1005
    %1572 = vmatpush.msra.mxu0 %v994
    %1573 = vmatpush.msra.mxu0 %v983
    %1574 = vmatpush.msra.mxu0 %v972
    %1575 = vmatpush.msra.mxu0 %v961
    %1576 = vmatmul.f32.gmra.mxu0 %v607
    %v1577 = vpop.f32.mrf.mxu0
    %v1578 = vadd.f32 %v1558, %v1577
    %1579 = vdwg.mxu0
    %1580 = vmatpush.msra.mxu0 %v775
    %1581 = vmatpush.msra.mxu0 %v764
    %1582 = vmatpush.msra.mxu0 %v753
    %1583 = vmatpush.msra.mxu0 %v742
    %1584 = vmatpush.msra.mxu0 %v731
    %1585 = vmatpush.msra.mxu0 %v720
    %1586 = vmatpush.msra.mxu0 %v709
    %1587 = vmatpush.msra.mxu0 %v698
    %1588 = vmatpush.msra.mxu0 %v687
    %1589 = vmatpush.msra.mxu0 %v676
    %1590 = vmatpush.msra.mxu0 %v665
    %1591 = vmatpush.msra.mxu0 %v654
    %1592 = vmatpush.msra.mxu0 %v643
    %1593 = vmatpush.msra.mxu0 %v632
    %1594 = vmatpush.msra.mxu0 %v621
    %1595 = vmatpush.msra.mxu0 %v610
    %1596 = vmatmul.f32.gmra.mxu0 %v605
    %v1597 = vpop.f32.mrf.mxu0
    %v1598 = vadd.f32 %v335, %v1597
    %1599 = vdwg.mxu0
    %1600 = vmatpush.msra.mxu0 %v951
    %1601 = vmatpush.msra.mxu0 %v940
    %1602 = vmatpush.msra.mxu0 %v929
    %1603 = vmatpush.msra.mxu0 %v918
    %1604 = vmatpush.msra.mxu0 %v907
    %1605 = vmatpush.msra.mxu0 %v896
    %1606 = vmatpush.msra.mxu0 %v885
    %1607 = vmatpush.msra.mxu0 %v874
    %1608 = vmatpush.msra.mxu0 %v863
    %1609 = vmatpush.msra.mxu0 %v852
    %1610 = vmatpush.msra.mxu0 %v841
    %1611 = vmatpush.msra.mxu0 %v830
    %1612 = vmatpush.msra.mxu0 %v819
    %1613 = vmatpush.msra.mxu0 %v808
    %1614 = vmatpush.msra.mxu0 %v797
    %1615 = vmatpush.msra.mxu0 %v786
    %1616 = vmatmul.f32.gmra.mxu0 %v606
    %v1617 = vpop.f32.mrf.mxu0
    %v1618 = vadd.f32 %v1598, %v1617
    %1619 = vdwg.mxu0
    %1620 = vmatpush.msra.mxu0 %v1127
    %1621 = vmatpush.msra.mxu0 %v1116
    %1622 = vmatpush.msra.mxu0 %v1105
    %1623 = vmatpush.msra.mxu0 %v1094
    %1624 = vmatpush.msra.mxu0 %v1083
    %1625 = vmatpush.msra.mxu0 %v1072
    %1626 = vmatpush.msra.mxu0 %v1061
    %1627 = vmatpush.msra.mxu0 %v1050
    %1628 = vmatpush.msra.mxu0 %v1039
    %1629 = vmatpush.msra.mxu0 %v1028
    %1630 = vmatpush.msra.mxu0 %v1017
    %1631 = vmatpush.msra.mxu0 %v1006
    %1632 = vmatpush.msra.mxu0 %v995
    %1633 = vmatpush.msra.mxu0 %v984
    %1634 = vmatpush.msra.mxu0 %v973
    %1635 = vmatpush.msra.mxu0 %v962
    %1636 = vmatmul.f32.gmra.mxu0 %v607
    %v1637 = vpop.f32.mrf.mxu0
    %v1638 = vadd.f32 %v1618, %v1637
    %1639 = vdwg.mxu0
    %1640 = vmatpush.msra.mxu0 %v776
    %1641 = vmatpush.msra.mxu0 %v765
    %1642 = vmatpush.msra.mxu0 %v754
    %1643 = vmatpush.msra.mxu0 %v743
    %1644 = vmatpush.msra.mxu0 %v732
    %1645 = vmatpush.msra.mxu0 %v721
    %1646 = vmatpush.msra.mxu0 %v710
    %1647 = vmatpush.msra.mxu0 %v699
    %1648 = vmatpush.msra.mxu0 %v688
    %1649 = vmatpush.msra.mxu0 %v677
    %1650 = vmatpush.msra.mxu0 %v666
    %1651 = vmatpush.msra.mxu0 %v655
    %1652 = vmatpush.msra.mxu0 %v644
    %1653 = vmatpush.msra.mxu0 %v633
    %1654 = vmatpush.msra.mxu0 %v622
    %1655 = vmatpush.msra.mxu0 %v611
    %1656 = vmatmul.f32.gmra.mxu0 %v605
    %v1657 = vpop.f32.mrf.mxu0
    %v1658 = vadd.f32 %v355, %v1657
    %1659 = vdwg.mxu0
    %1660 = vmatpush.msra.mxu0 %v952
    %1661 = vmatpush.msra.mxu0 %v941
    %1662 = vmatpush.msra.mxu0 %v930
    %1663 = vmatpush.msra.mxu0 %v919
    %1664 = vmatpush.msra.mxu0 %v908
    %1665 = vmatpush.msra.mxu0 %v897
    %1666 = vmatpush.msra.mxu0 %v886
    %1667 = vmatpush.msra.mxu0 %v875
    %1668 = vmatpush.msra.mxu0 %v864
    %1669 = vmatpush.msra.mxu0 %v853
    %1670 = vmatpush.msra.mxu0 %v842
    %1671 = vmatpush.msra.mxu0 %v831
    %1672 = vmatpush.msra.mxu0 %v820
    %1673 = vmatpush.msra.mxu0 %v809
    %1674 = vmatpush.msra.mxu0 %v798
    %1675 = vmatpush.msra.mxu0 %v787
    %1676 = vmatmul.f32.gmra.mxu0 %v606
    %v1677 = vpop.f32.mrf.mxu0
    %v1678 = vadd.f32 %v1658, %v1677
    %1679 = vdwg.mxu0
    %1680 = vmatpush.msra.mxu0 %v1128
    %1681 = vmatpush.msra.mxu0 %v1117
    %1682 = vmatpush.msra.mxu0 %v1106
    %1683 = vmatpush.msra.mxu0 %v1095
    %1684 = vmatpush.msra.mxu0 %v1084
    %1685 = vmatpush.msra.mxu0 %v1073
    %1686 = vmatpush.msra.mxu0 %v1062
    %1687 = vmatpush.msra.mxu0 %v1051
    %1688 = vmatpush.msra.mxu0 %v1040
    %1689 = vmatpush.msra.mxu0 %v1029
    %1690 = vmatpush.msra.mxu0 %v1018
    %1691 = vmatpush.msra.mxu0 %v1007
    %1692 = vmatpush.msra.mxu0 %v996
    %1693 = vmatpush.msra.mxu0 %v985
    %1694 = vmatpush.msra.mxu0 %v974
    %1695 = vmatpush.msra.mxu0 %v963
    %1696 = vmatmul.f32.gmra.mxu0 %v607
    %v1697 = vpop.f32.mrf.mxu0
    %v1698 = vadd.f32 %v1678, %v1697
    %1699 = vdwg.mxu0
    %1700 = vmatpush.msra.mxu0 %v777
    %1701 = vmatpush.msra.mxu0 %v766
    %1702 = vmatpush.msra.mxu0 %v755
    %1703 = vmatpush.msra.mxu0 %v744
    %1704 = vmatpush.msra.mxu0 %v733
    %1705 = vmatpush.msra.mxu0 %v722
    %1706 = vmatpush.msra.mxu0 %v711
    %1707 = vmatpush.msra.mxu0 %v700
    %1708 = vmatpush.msra.mxu0 %v689
    %1709 = vmatpush.msra.mxu0 %v678
    %1710 = vmatpush.msra.mxu0 %v667
    %1711 = vmatpush.msra.mxu0 %v656
    %1712 = vmatpush.msra.mxu0 %v645
    %1713 = vmatpush.msra.mxu0 %v634
    %1714 = vmatpush.msra.mxu0 %v623
    %1715 = vmatpush.msra.mxu0 %v612
    %1716 = vmatmul.f32.gmra.mxu0 %v605
    %v1717 = vpop.f32.mrf.mxu0
    %v1718 = vadd.f32 %v375, %v1717
    %1719 = vdwg.mxu0
    %1720 = vmatpush.msra.mxu0 %v953
    %1721 = vmatpush.msra.mxu0 %v942
    %1722 = vmatpush.msra.mxu0 %v931
    %1723 = vmatpush.msra.mxu0 %v920
    %1724 = vmatpush.msra.mxu0 %v909
    %1725 = vmatpush.msra.mxu0 %v898
    %1726 = vmatpush.msra.mxu0 %v887
    %1727 = vmatpush.msra.mxu0 %v876
    %1728 = vmatpush.msra.mxu0 %v865
    %1729 = vmatpush.msra.mxu0 %v854
    %1730 = vmatpush.msra.mxu0 %v843
    %1731 = vmatpush.msra.mxu0 %v832
    %1732 = vmatpush.msra.mxu0 %v821
    %1733 = vmatpush.msra.mxu0 %v810
    %1734 = vmatpush.msra.mxu0 %v799
    %1735 = vmatpush.msra.mxu0 %v788
    %1736 = vmatmul.f32.gmra.mxu0 %v606
    %v1737 = vpop.f32.mrf.mxu0
    %v1738 = vadd.f32 %v1718, %v1737
    %1739 = vdwg.mxu0
    %1740 = vmatpush.msra.mxu0 %v1129
    %1741 = vmatpush.msra.mxu0 %v1118
    %1742 = vmatpush.msra.mxu0 %v1107
    %1743 = vmatpush.msra.mxu0 %v1096
    %1744 = vmatpush.msra.mxu0 %v1085
    %1745 = vmatpush.msra.mxu0 %v1074
    %1746 = vmatpush.msra.mxu0 %v1063
    %1747 = vmatpush.msra.mxu0 %v1052
    %1748 = vmatpush.msra.mxu0 %v1041
    %1749 = vmatpush.msra.mxu0 %v1030
    %1750 = vmatpush.msra.mxu0 %v1019
    %1751 = vmatpush.msra.mxu0 %v1008
    %1752 = vmatpush.msra.mxu0 %v997
    %1753 = vmatpush.msra.mxu0 %v986
    %1754 = vmatpush.msra.mxu0 %v975
    %1755 = vmatpush.msra.mxu0 %v964
    %1756 = vmatmul.f32.gmra.mxu0 %v607
    %v1757 = vpop.f32.mrf.mxu0
    %v1758 = vadd.f32 %v1738, %v1757
    %1759 = vdwg.mxu0
    %1760 = vmatpush.msra.mxu0 %v778
    %1761 = vmatpush.msra.mxu0 %v767
    %1762 = vmatpush.msra.mxu0 %v756
    %1763 = vmatpush.msra.mxu0 %v745
    %1764 = vmatpush.msra.mxu0 %v734
    %1765 = vmatpush.msra.mxu0 %v723
    %1766 = vmatpush.msra.mxu0 %v712
    %1767 = vmatpush.msra.mxu0 %v701
    %1768 = vmatpush.msra.mxu0 %v690
    %1769 = vmatpush.msra.mxu0 %v679
    %1770 = vmatpush.msra.mxu0 %v668
    %1771 = vmatpush.msra.mxu0 %v657
    %1772 = vmatpush.msra.mxu0 %v646
    %1773 = vmatpush.msra.mxu0 %v635
    %1774 = vmatpush.msra.mxu0 %v624
    %1775 = vmatpush.msra.mxu0 %v613
    %1776 = vmatmul.f32.gmra.mxu0 %v605
    %v1777 = vpop.f32.mrf.mxu0
    %v1778 = vadd.f32 %v395, %v1777
    %1779 = vdwg.mxu0
    %1780 = vmatpush.msra.mxu0 %v954
    %1781 = vmatpush.msra.mxu0 %v943
    %1782 = vmatpush.msra.mxu0 %v932
    %1783 = vmatpush.msra.mxu0 %v921
    %1784 = vmatpush.msra.mxu0 %v910
    %1785 = vmatpush.msra.mxu0 %v899
    %1786 = vmatpush.msra.mxu0 %v888
    %1787 = vmatpush.msra.mxu0 %v877
    %1788 = vmatpush.msra.mxu0 %v866
    %1789 = vmatpush.msra.mxu0 %v855
    %1790 = vmatpush.msra.mxu0 %v844
    %1791 = vmatpush.msra.mxu0 %v833
    %1792 = vmatpush.msra.mxu0 %v822
    %1793 = vmatpush.msra.mxu0 %v811
    %1794 = vmatpush.msra.mxu0 %v800
    %1795 = vmatpush.msra.mxu0 %v789
    %1796 = vmatmul.f32.gmra.mxu0 %v606
    %v1797 = vpop.f32.mrf.mxu0
    %v1798 = vadd.f32 %v1778, %v1797
    %1799 = vdwg.mxu0
    %1800 = vmatpush.msra.mxu0 %v1130
    %1801 = vmatpush.msra.mxu0 %v1119
    %1802 = vmatpush.msra.mxu0 %v1108
    %1803 = vmatpush.msra.mxu0 %v1097
    %1804 = vmatpush.msra.mxu0 %v1086
    %1805 = vmatpush.msra.mxu0 %v1075
    %1806 = vmatpush.msra.mxu0 %v1064
    %1807 = vmatpush.msra.mxu0 %v1053
    %1808 = vmatpush.msra.mxu0 %v1042
    %1809 = vmatpush.msra.mxu0 %v1031
    %1810 = vmatpush.msra.mxu0 %v1020
    %1811 = vmatpush.msra.mxu0 %v1009
    %1812 = vmatpush.msra.mxu0 %v998
    %1813 = vmatpush.msra.mxu0 %v987
    %1814 = vmatpush.msra.mxu0 %v976
    %1815 = vmatpush.msra.mxu0 %v965
    %1816 = vmatmul.f32.gmra.mxu0 %v607
    %v1817 = vpop.f32.mrf.mxu0
    %v1818 = vadd.f32 %v1798, %v1817
    %1819 = vdwg.mxu0
    %1820 = vmatpush.msra.mxu0 %v779
    %1821 = vmatpush.msra.mxu0 %v768
    %1822 = vmatpush.msra.mxu0 %v757
    %1823 = vmatpush.msra.mxu0 %v746
    %1824 = vmatpush.msra.mxu0 %v735
    %1825 = vmatpush.msra.mxu0 %v724
    %1826 = vmatpush.msra.mxu0 %v713
    %1827 = vmatpush.msra.mxu0 %v702
    %1828 = vmatpush.msra.mxu0 %v691
    %1829 = vmatpush.msra.mxu0 %v680
    %1830 = vmatpush.msra.mxu0 %v669
    %1831 = vmatpush.msra.mxu0 %v658
    %1832 = vmatpush.msra.mxu0 %v647
    %1833 = vmatpush.msra.mxu0 %v636
    %1834 = vmatpush.msra.mxu0 %v625
    %1835 = vmatpush.msra.mxu0 %v614
    %1836 = vmatmul.f32.gmra.mxu0 %v605
    %v1837 = vpop.f32.mrf.mxu0
    %v1838 = vadd.f32 %v415, %v1837
    %1839 = vdwg.mxu0
    %1840 = vmatpush.msra.mxu0 %v955
    %1841 = vmatpush.msra.mxu0 %v944
    %1842 = vmatpush.msra.mxu0 %v933
    %1843 = vmatpush.msra.mxu0 %v922
    %1844 = vmatpush.msra.mxu0 %v911
    %1845 = vmatpush.msra.mxu0 %v900
    %1846 = vmatpush.msra.mxu0 %v889
    %1847 = vmatpush.msra.mxu0 %v878
    %1848 = vmatpush.msra.mxu0 %v867
    %1849 = vmatpush.msra.mxu0 %v856
    %1850 = vmatpush.msra.mxu0 %v845
    %1851 = vmatpush.msra.mxu0 %v834
    %1852 = vmatpush.msra.mxu0 %v823
    %1853 = vmatpush.msra.mxu0 %v812
    %1854 = vmatpush.msra.mxu0 %v801
    %1855 = vmatpush.msra.mxu0 %v790
    %1856 = vmatmul.f32.gmra.mxu0 %v606
    %v1857 = vpop.f32.mrf.mxu0
    %v1858 = vadd.f32 %v1838, %v1857
    %1859 = vdwg.mxu0
    %1860 = vmatpush.msra.mxu0 %v1131
    %1861 = vmatpush.msra.mxu0 %v1120
    %1862 = vmatpush.msra.mxu0 %v1109
    %1863 = vmatpush.msra.mxu0 %v1098
    %1864 = vmatpush.msra.mxu0 %v1087
    %1865 = vmatpush.msra.mxu0 %v1076
    %1866 = vmatpush.msra.mxu0 %v1065
    %1867 = vmatpush.msra.mxu0 %v1054
    %1868 = vmatpush.msra.mxu0 %v1043
    %1869 = vmatpush.msra.mxu0 %v1032
    %1870 = vmatpush.msra.mxu0 %v1021
    %1871 = vmatpush.msra.mxu0 %v1010
    %1872 = vmatpush.msra.mxu0 %v999
    %1873 = vmatpush.msra.mxu0 %v988
    %1874 = vmatpush.msra.mxu0 %v977
    %1875 = vmatpush.msra.mxu0 %v966
    %1876 = vmatmul.f32.gmra.mxu0 %v607
    %v1877 = vpop.f32.mrf.mxu0
    %v1878 = vadd.f32 %v1858, %v1877
    %1879 = vdwg.mxu0
    %1880 = vmatpush.msra.mxu0 %v780
    %1881 = vmatpush.msra.mxu0 %v769
    %1882 = vmatpush.msra.mxu0 %v758
    %1883 = vmatpush.msra.mxu0 %v747
    %1884 = vmatpush.msra.mxu0 %v736
    %1885 = vmatpush.msra.mxu0 %v725
    %1886 = vmatpush.msra.mxu0 %v714
    %1887 = vmatpush.msra.mxu0 %v703
    %1888 = vmatpush.msra.mxu0 %v692
    %1889 = vmatpush.msra.mxu0 %v681
    %1890 = vmatpush.msra.mxu0 %v670
    %1891 = vmatpush.msra.mxu0 %v659
    %1892 = vmatpush.msra.mxu0 %v648
    %1893 = vmatpush.msra.mxu0 %v637
    %1894 = vmatpush.msra.mxu0 %v626
    %1895 = vmatpush.msra.mxu0 %v615
    %1896 = vmatmul.f32.gmra.mxu0 %v605
    %v1897 = vpop.f32.mrf.mxu0
    %v1898 = vadd.f32 %v435, %v1897
    %1899 = vdwg.mxu0
    %1900 = vmatpush.msra.mxu0 %v956
    %1901 = vmatpush.msra.mxu0 %v945
    %1902 = vmatpush.msra.mxu0 %v934
    %1903 = vmatpush.msra.mxu0 %v923
    %1904 = vmatpush.msra.mxu0 %v912
    %1905 = vmatpush.msra.mxu0 %v901
    %1906 = vmatpush.msra.mxu0 %v890
    %1907 = vmatpush.msra.mxu0 %v879
    %1908 = vmatpush.msra.mxu0 %v868
    %1909 = vmatpush.msra.mxu0 %v857
    %1910 = vmatpush.msra.mxu0 %v846
    %1911 = vmatpush.msra.mxu0 %v835
    %1912 = vmatpush.msra.mxu0 %v824
    %1913 = vmatpush.msra.mxu0 %v813
    %1914 = vmatpush.msra.mxu0 %v802
    %1915 = vmatpush.msra.mxu0 %v791
    %1916 = vmatmul.f32.gmra.mxu0 %v606
    %v1917 = vpop.f32.mrf.mxu0
    %v1918 = vadd.f32 %v1898, %v1917
    %1919 = vdwg.mxu0
    %1920 = vmatpush.msra.mxu0 %v1132
    %1921 = vmatpush.msra.mxu0 %v1121
    %1922 = vmatpush.msra.mxu0 %v1110
    %1923 = vmatpush.msra.mxu0 %v1099
    %1924 = vmatpush.msra.mxu0 %v1088
    %1925 = vmatpush.msra.mxu0 %v1077
    %1926 = vmatpush.msra.mxu0 %v1066
    %1927 = vmatpush.msra.mxu0 %v1055
    %1928 = vmatpush.msra.mxu0 %v1044
    %1929 = vmatpush.msra.mxu0 %v1033
    %1930 = vmatpush.msra.mxu0 %v1022
    %1931 = vmatpush.msra.mxu0 %v1011
    %1932 = vmatpush.msra.mxu0 %v1000
    %1933 = vmatpush.msra.mxu0 %v989
    %1934 = vmatpush.msra.mxu0 %v978
    %1935 = vmatpush.msra.mxu0 %v967
    %1936 = vmatmul.f32.gmra.mxu0 %v607
    %v1937 = vpop.f32.mrf.mxu0
    %v1938 = vadd.f32 %v1918, %v1937
    %1939 = vdwg.mxu0
    %1940 = vmatpush.msra.mxu0 %v781
    %1941 = vmatpush.msra.mxu0 %v770
    %1942 = vmatpush.msra.mxu0 %v759
    %1943 = vmatpush.msra.mxu0 %v748
    %1944 = vmatpush.msra.mxu0 %v737
    %1945 = vmatpush.msra.mxu0 %v726
    %1946 = vmatpush.msra.mxu0 %v715
    %1947 = vmatpush.msra.mxu0 %v704
    %1948 = vmatpush.msra.mxu0 %v693
    %1949 = vmatpush.msra.mxu0 %v682
    %1950 = vmatpush.msra.mxu0 %v671
    %1951 = vmatpush.msra.mxu0 %v660
    %1952 = vmatpush.msra.mxu0 %v649
    %1953 = vmatpush.msra.mxu0 %v638
    %1954 = vmatpush.msra.mxu0 %v627
    %1955 = vmatpush.msra.mxu0 %v616
    %1956 = vmatmul.f32.gmra.mxu0 %v605
    %v1957 = vpop.f32.mrf.mxu0
    %v1958 = vadd.f32 %v455, %v1957
    %1959 = vdwg.mxu0
    %1960 = vmatpush.msra.mxu0 %v957
    %1961 = vmatpush.msra.mxu0 %v946
    %1962 = vmatpush.msra.mxu0 %v935
    %1963 = vmatpush.msra.mxu0 %v924
    %1964 = vmatpush.msra.mxu0 %v913
    %1965 = vmatpush.msra.mxu0 %v902
    %1966 = vmatpush.msra.mxu0 %v891
    %1967 = vmatpush.msra.mxu0 %v880
    %1968 = vmatpush.msra.mxu0 %v869
    %1969 = vmatpush.msra.mxu0 %v858
    %1970 = vmatpush.msra.mxu0 %v847
    %1971 = vmatpush.msra.mxu0 %v836
    %1972 = vmatpush.msra.mxu0 %v825
    %1973 = vmatpush.msra.mxu0 %v814
    %1974 = vmatpush.msra.mxu0 %v803
    %1975 = vmatpush.msra.mxu0 %v792
    %1976 = vmatmul.f32.gmra.mxu0 %v606
    %v1977 = vpop.f32.mrf.mxu0
    %v1978 = vadd.f32 %v1958, %v1977
    %1979 = vdwg.mxu0
    %1980 = vmatpush.msra.mxu0 %v1133
    %1981 = vmatpush.msra.mxu0 %v1122
    %1982 = vmatpush.msra.mxu0 %v1111
    %1983 = vmatpush.msra.mxu0 %v1100
    %1984 = vmatpush.msra.mxu0 %v1089
    %1985 = vmatpush.msra.mxu0 %v1078
    %1986 = vmatpush.msra.mxu0 %v1067
    %1987 = vmatpush.msra.mxu0 %v1056
    %1988 = vmatpush.msra.mxu0 %v1045
    %1989 = vmatpush.msra.mxu0 %v1034
    %1990 = vmatpush.msra.mxu0 %v1023
    %1991 = vmatpush.msra.mxu0 %v1012
    %1992 = vmatpush.msra.mxu0 %v1001
    %1993 = vmatpush.msra.mxu0 %v990
    %1994 = vmatpush.msra.mxu0 %v979
    %1995 = vmatpush.msra.mxu0 %v968
    %1996 = vmatmul.f32.gmra.mxu0 %v607
    %v1997 = vpop.f32.mrf.mxu0
    %v1998 = vadd.f32 %v1978, %v1997
    %1999 = vdwg.mxu0
    %2000 = vmatpush.msra.mxu0 %v782
    %2001 = vmatpush.msra.mxu0 %v771
    %2002 = vmatpush.msra.mxu0 %v760
    %2003 = vmatpush.msra.mxu0 %v749
    %2004 = vmatpush.msra.mxu0 %v738
    %2005 = vmatpush.msra.mxu0 %v727
    %2006 = vmatpush.msra.mxu0 %v716
    %2007 = vmatpush.msra.mxu0 %v705
    %2008 = vmatpush.msra.mxu0 %v694
    %2009 = vmatpush.msra.mxu0 %v683
    %2010 = vmatpush.msra.mxu0 %v672
    %2011 = vmatpush.msra.mxu0 %v661
    %2012 = vmatpush.msra.mxu0 %v650
    %2013 = vmatpush.msra.mxu0 %v639
    %2014 = vmatpush.msra.mxu0 %v628
    %2015 = vmatpush.msra.mxu0 %v617
    %2016 = vmatmul.f32.gmra.mxu0 %v605
    %v2017 = vpop.f32.mrf.mxu0
    %v2018 = vadd.f32 %v475, %v2017
    %2019 = vdwg.mxu0
    %2020 = vmatpush.msra.mxu0 %v958
    %2021 = vmatpush.msra.mxu0 %v947
    %2022 = vmatpush.msra.mxu0 %v936
    %2023 = vmatpush.msra.mxu0 %v925
    %2024 = vmatpush.msra.mxu0 %v914
    %2025 = vmatpush.msra.mxu0 %v903
    %2026 = vmatpush.msra.mxu0 %v892
    %2027 = vmatpush.msra.mxu0 %v881
    %2028 = vmatpush.msra.mxu0 %v870
    %2029 = vmatpush.msra.mxu0 %v859
    %2030 = vmatpush.msra.mxu0 %v848
    %2031 = vmatpush.msra.mxu0 %v837
    %2032 = vmatpush.msra.mxu0 %v826
    %2033 = vmatpush.msra.mxu0 %v815
    %2034 = vmatpush.msra.mxu0 %v804
    %2035 = vmatpush.msra.mxu0 %v793
    %2036 = vmatmul.f32.gmra.mxu0 %v606
    %v2037 = vpop.f32.mrf.mxu0
    %v2038 = vadd.f32 %v2018, %v2037
    %2039 = vdwg.mxu0
    %2040 = vmatpush.msra.mxu0 %v1134
    %2041 = vmatpush.msra.mxu0 %v1123
    %2042 = vmatpush.msra.mxu0 %v1112
    %2043 = vmatpush.msra.mxu0 %v1101
    %2044 = vmatpush.msra.mxu0 %v1090
    %2045 = vmatpush.msra.mxu0 %v1079
    %2046 = vmatpush.msra.mxu0 %v1068
    %2047 = vmatpush.msra.mxu0 %v1057
    %2048 = vmatpush.msra.mxu0 %v1046
    %2049 = vmatpush.msra.mxu0 %v1035
    %2050 = vmatpush.msra.mxu0 %v1024
    %2051 = vmatpush.msra.mxu0 %v1013
    %2052 = vmatpush.msra.mxu0 %v1002
    %2053 = vmatpush.msra.mxu0 %v991
    %2054 = vmatpush.msra.mxu0 %v980
    %2055 = vmatpush.msra.mxu0 %v969
    %2056 = vmatmul.f32.gmra.mxu0 %v607
    %v2057 = vpop.f32.mrf.mxu0
    %v2058 = vadd.f32 %v2038, %v2057
    %2059 = vdwg.mxu0
    %2060 = vmatpush.msra.mxu0 %v783
    %2061 = vmatpush.msra.mxu0 %v772
    %2062 = vmatpush.msra.mxu0 %v761
    %2063 = vmatpush.msra.mxu0 %v750
    %2064 = vmatpush.msra.mxu0 %v739
    %2065 = vmatpush.msra.mxu0 %v728
    %2066 = vmatpush.msra.mxu0 %v717
    %2067 = vmatpush.msra.mxu0 %v706
    %2068 = vmatpush.msra.mxu0 %v695
    %2069 = vmatpush.msra.mxu0 %v684
    %2070 = vmatpush.msra.mxu0 %v673
    %2071 = vmatpush.msra.mxu0 %v662
    %2072 = vmatpush.msra.mxu0 %v651
    %2073 = vmatpush.msra.mxu0 %v640
    %2074 = vmatpush.msra.mxu0 %v629
    %2075 = vmatpush.msra.mxu0 %v618
    %2076 = vmatmul.f32.gmra.mxu0 %v605
    %v2077 = vpop.f32.mrf.mxu0
    %v2078 = vadd.f32 %v495, %v2077
    %2079 = vdwg.mxu0
    %2080 = vmatpush.msra.mxu0 %v959
    %2081 = vmatpush.msra.mxu0 %v948
    %2082 = vmatpush.msra.mxu0 %v937
    %2083 = vmatpush.msra.mxu0 %v926
    %2084 = vmatpush.msra.mxu0 %v915
    %2085 = vmatpush.msra.mxu0 %v904
    %2086 = vmatpush.msra.mxu0 %v893
    %2087 = vmatpush.msra.mxu0 %v882
    %2088 = vmatpush.msra.mxu0 %v871
    %2089 = vmatpush.msra.mxu0 %v860
    %2090 = vmatpush.msra.mxu0 %v849
    %2091 = vmatpush.msra.mxu0 %v838
    %2092 = vmatpush.msra.mxu0 %v827
    %2093 = vmatpush.msra.mxu0 %v816
    %2094 = vmatpush.msra.mxu0 %v805
    %2095 = vmatpush.msra.mxu0 %v794
    %2096 = vmatmul.f32.gmra.mxu0 %v606
    %v2097 = vpop.f32.mrf.mxu0
    %v2098 = vadd.f32 %v2078, %v2097
    %2099 = vdwg.mxu0
    %2100 = vmatpush.msra.mxu0 %v1135
    %2101 = vmatpush.msra.mxu0 %v1124
    %2102 = vmatpush.msra.mxu0 %v1113
    %2103 = vmatpush.msra.mxu0 %v1102
    %2104 = vmatpush.msra.mxu0 %v1091
    %2105 = vmatpush.msra.mxu0 %v1080
    %2106 = vmatpush.msra.mxu0 %v1069
    %2107 = vmatpush.msra.mxu0 %v1058
    %2108 = vmatpush.msra.mxu0 %v1047
    %2109 = vmatpush.msra.mxu0 %v1036
    %2110 = vmatpush.msra.mxu0 %v1025
    %2111 = vmatpush.msra.mxu0 %v1014
    %2112 = vmatpush.msra.mxu0 %v1003
    %2113 = vmatpush.msra.mxu0 %v992
    %2114 = vmatpush.msra.mxu0 %v981
    %2115 = vmatpush.msra.mxu0 %v970
    %2116 = vmatmul.f32.gmra.mxu0 %v607
    %v2117 = vpop.f32.mrf.mxu0
    %v2118 = vadd.f32 %v2098, %v2117
    %2119 = vdwg.mxu0
    %v2120 = vmul.f32 %v1518, %v1258
    %v2121 = vmul.f32 %v1578, %v1278
    %v2122 = vmul.f32 %v1638, %v1298
    %v2123 = vmul.f32 %v1698, %v1318
    %v2124 = vmul.f32 %v1758, %v1338
    %v2125 = vmul.f32 %v1818, %v1358
    %v2126 = vmul.f32 %v1878, %v1378
    %v2127 = vmul.f32 %v1938, %v1398
    %v2128 = vmul.f32 %v1998, %v1418
    %v2129 = vmul.f32 %v2058, %v1438
    %v2130 = vmul.f32 %v2118, %v1458
    %2131 = vst [vmem:[#allocation2] sm:$0xff] %v2120
    %2132 = vst [vmem:[#allocation2 + $0x8] sm:$0xff] %v2121
    %2133 = vst [vmem:[#allocation2 + $0x10] sm:$0xff] %v2122
    %2134 = vst [vmem:[#allocation2 + $0x18] sm:$0xff] %v2123
    %2135 = vst [vmem:[#allocation2 + $0x20] sm:$0xff] %v2124
    %2136 = vst [vmem:[#allocation2 + $0x28] sm:$0xff] %v2125
    %2137 = vst [vmem:[#allocation2 + $0x30] sm:$0xff] %v2126
    %2138 = vst [vmem:[#allocation2 + $0x38] sm:$0xff] %v2127
    %2139 = vst [vmem:[#allocation2 + $0x40] sm:$0xff] %v2128
    %2140 = vst [vmem:[#allocation2 + $0x48] sm:$0xff] %v2129
    %vm2141 = vcmask 785408
    %2142 = vst.msk [vmem:[#allocation2 + $0x50] sm:$0xff] %vm2141, %v2130
    // Predicated region
    $region42: #{tpu_custom_call.1} parent=1 // pred_check
      _
    $region43: #{tpu_custom_call.1} parent=1 // pred_check_branch
      %2144 = sbr.rel (0) target = $region45
    $region44: #{tpu_custom_call.1} parent=1 // pred_region
      %2146 = vsyncadd [#allocation3], 0
      %s2148 = sshll.u32 [#allocation2], 4
      %s2149 = int_to_ptr.vmem [resolvable:$true] %s2148
      %s2150 = sshll.u32 %s10, 4
      %s2151 = int_to_ptr.hbm [resolvable:$true] %s2150
      %2153 = dma.vmem_to_hbm [thread:$0]  %s2149, 1408, %s2151, [#allocation3]
    $region45: #{tpu_custom_call.1} parent=1 // pred_fallthru
      _
    // Predicated region
    $region46: #{tpu_custom_call.1} parent=1 // pred_check
      _
    $region47: #{tpu_custom_call.1} parent=1 // pred_check_branch
      %2155 = sbr.rel (0) target = $region49
    $region48: #{tpu_custom_call.1} parent=1 // pred_region
      %2157 = dma.done [#allocation3], 1408
    $region49: #{tpu_custom_call.1} parent=1 // pred_fallthru
      _
    %2158 = vsyncpa [#allocation3], 1

</llo_original>
